<compile_context>
chip_gen: v6e
topology: v6e:2x2x1
jax: 0.10.0
libtpu: 0.0.40
codegen_flags: <defaults>
</compile_context>

<pallas_src>
import jax
import jax.numpy as jnp
from jax.experimental import pallas as pl
from jax.experimental.pallas import tpu as pltpu


def _round_up(x, m):
    return (x + m - 1) // m * m


def mean_agg_kernel(mask_ref, dw_ref, fw_ref, emb_ref, out_ref,
                    acc_ref, rowsum_ref):
    """Accumulate (mask*dw*fw) @ emb and rowsum(mask) over the U (k) axis;
    on the last k step: out = tanh(acc * 1/max(rowsum, 1))."""
    k = pl.program_id(1)

    @pl.when(k == 0)
    def _():
        acc_ref[...] = jnp.zeros_like(acc_ref)
        rowsum_ref[...] = jnp.zeros_like(rowsum_ref)

    mask = mask_ref[...]                                     # (tb, tu) f32
    # Elementwise weighting kept in f32 (v5e-friendly).
    w = mask * dw_ref[...] * fw_ref[...]                     # (tb, tu) f32
    rowsum_ref[...] += jnp.sum(mask, axis=1, keepdims=True)  # (tb, 1)
    # MXU matmul: bf16 operands, f32 accumulation.
    acc_ref[...] += jnp.dot(w.astype(jnp.bfloat16),
                            emb_ref[...].astype(jnp.bfloat16),
                            preferred_element_type=jnp.float32)

    @pl.when(k == pl.num_programs(1) - 1)
    def _():
        # Guard zero-neighbor rows (and B padding rows) against divide-by-zero.
        denom = jnp.maximum(rowsum_ref[...], 1.0)
        inv = pl.reciprocal(denom, approx=True)              # EUP slot, ~free
        out_ref[...] = jnp.tanh(acc_ref[...] * inv).astype(out_ref.dtype)


def mean_aggregator_forward(mask, d_weight, f_weight, embed_matrix,
                            *, tb=256, tu=512):
    B, U = mask.shape
    U2, D = embed_matrix.shape
    assert U == U2

    # Clamp tile sizes to the (aligned) problem size; keep (8,128) alignment.
    tb = min(tb, _round_up(B, 8))
    tu = min(tu, _round_up(U, 128))
    Bp, Up, Dp = _round_up(B, tb), _round_up(U, tu), _round_up(D, 128)

    f32 = jnp.float32
    mask = jnp.pad(mask.astype(f32), ((0, Bp - B), (0, Up - U)))
    d_weight = jnp.pad(d_weight.astype(f32), ((0, Bp - B), (0, Up - U)))
    f_weight = jnp.pad(f_weight.astype(f32), ((0, Bp - B), (0, Up - U)))
    embed_matrix = jnp.pad(embed_matrix.astype(f32), ((0, Up - U), (0, Dp - D)))

    grid = (Bp // tb, Up // tu)

    out = pl.pallas_call(
        mean_agg_kernel,
        out_shape=jax.ShapeDtypeStruct((Bp, Dp), jnp.float32),
        grid_spec=pltpu.PrefetchScalarGridSpec(
            num_scalar_prefetch=0,
            grid=grid,
            in_specs=[
                pl.BlockSpec((tb, tu), lambda i, k: (i, k)),   # mask
                pl.BlockSpec((tb, tu), lambda i, k: (i, k)),   # d_weight
                pl.BlockSpec((tb, tu), lambda i, k: (i, k)),   # f_weight
                pl.BlockSpec((tu, Dp), lambda i, k: (k, 0)),   # embed (B-invariant)
            ],
            out_specs=pl.BlockSpec((tb, Dp), lambda i, k: (i, 0)),
            scratch_shapes=[
                pltpu.VMEM((tb, Dp), jnp.float32),   # matmul accumulator
                pltpu.VMEM((tb, 1), jnp.float32),    # rowsum accumulator
            ],
        ),
        compiler_params=pltpu.CompilerParams(
            dimension_semantics=("parallel", "arbitrary"),
            vmem_limit_bytes=48 * 1024 * 1024,   # ~25% headroom on v7x's 64 MiB
        ),
    )(mask, d_weight, f_weight, embed_matrix)

    return out[:B, :D]


def _reference(mask, d_weight, f_weight, embed_matrix):
    num_neigh = jnp.sum(mask, axis=1, keepdims=True)
    w = (mask / num_neigh) * d_weight * f_weight
    return jnp.tanh(w @ embed_matrix)


if __name__ == "__main__":
    # Deterministic synthetic inputs standing in for the module's host-side
    # graph bookkeeping.  Sizes are small but exercise B padding (200 -> 208)
    # and U-reduction tiling (640 -> two 512-wide slabs after padding).
    B, U, D = 200, 640, 256

    key = jax.random.PRNGKey(0)
    k_mask, k_dw, k_fw, k_emb = jax.random.split(key, 4)

    # Binary adjacency-style mask; force at least one neighbor per row.
    mask = jax.random.bernoulli(k_mask, p=0.15, shape=(B, U)).astype(jnp.float32)
    mask = mask.at[:, 0].set(1.0)

    # d_weight in (0.5, 1.0] like 1/(1+exp(ww)); f_weight near 1 like the
    # similarity residuals (default ones in the reference code).
    d_weight = 0.5 + 0.5 * jax.random.uniform(k_dw, (B, U), dtype=jnp.float32)
    f_weight = 1.0 + 0.1 * jax.random.uniform(k_fw, (B, U), dtype=jnp.float32)

    # "features(unique_nodes)" -> embedding matrix.
    embed_matrix = jax.random.normal(k_emb, (U, D), dtype=jnp.float32)

    out = mean_aggregator_forward(mask, d_weight, f_weight, embed_matrix)
    out = jax.block_until_ready(out)

    ref = _reference(mask, d_weight, f_weight, embed_matrix)
    assert out.shape == (B, D)
    # bf16 matmul operands + approx reciprocal -> relaxed tolerance vs f32 ref.
    assert jnp.allclose(out, ref, atol=2e-2, rtol=2e-2), float(
        jnp.max(jnp.abs(out - ref)))

    print("KERNEL_OK")
</pallas_src>

<mosaic_0001>
module attributes {stable_mosaic.version = 11 : i64} {
  func.func @mean_agg_kernel(%arg0: i32, %arg1: i32, %arg2: memref<200x512xf32, #tpu.memory_space<vmem>>, %arg3: memref<200x512xf32, #tpu.memory_space<vmem>>, %arg4: memref<200x512xf32, #tpu.memory_space<vmem>>, %arg5: memref<512x256xf32, #tpu.memory_space<vmem>>, %arg6: memref<200x256xf32, #tpu.memory_space<vmem>>, %arg7: memref<200x256xf32, #tpu.memory_space<vmem>>, %arg8: memref<200x1xf32, #tpu.memory_space<vmem>>) attributes {dimension_semantics = [#tpu.dimension_semantics<parallel>, #tpu.dimension_semantics<arbitrary>], iteration_bounds = array<i64: 1, 2>, scalar_prefetch = 0 : i64, scratch_operands = 2 : i64, tpu.core_type = #tpu.core_type<tc>, window_params = [{transform_indices = @transform_0, window_bounds = array<i64: 200, 512>}, {transform_indices = @transform_1, window_bounds = array<i64: 200, 512>}, {transform_indices = @transform_2, window_bounds = array<i64: 200, 512>}, {transform_indices = @transform_3, window_bounds = array<i64: 512, 256>}, {transform_indices = @transform_4, window_bounds = array<i64: 200, 256>}]} {
    %c0_i32 = arith.constant 0 : i32
    %0 = arith.cmpi eq, %arg1, %c0_i32 : i32
    %1 = arith.extui %0 : i1 to i32
    %c0_i32_0 = arith.constant 0 : i32
    %2 = arith.cmpi ne, %1, %c0_i32_0 : i32
    scf.if %2 {
      %cst_18 = arith.constant 0.000000e+00 : f32
      %23 = vector.broadcast %cst_18 : f32 to vector<200x256xf32>
      %c0_19 = arith.constant 0 : index
      %c0_20 = arith.constant 0 : index
      %24 = vector.load %arg7[%c0_19, %c0_20] : memref<200x256xf32, #tpu.memory_space<vmem>>, vector<200x256xf32>
      tpu.vector_store %arg7[%c0_19, %c0_20], %23 {strides = array<i32>} : memref<200x256xf32, #tpu.memory_space<vmem>>, vector<200x256xf32>,
      %cst_21 = arith.constant 0.000000e+00 : f32
      %25 = vector.broadcast %cst_21 : f32 to vector<200x1xf32>
      %c0_22 = arith.constant 0 : index
      %c0_23 = arith.constant 0 : index
      %26 = vector.load %arg8[%c0_22, %c0_23] : memref<200x1xf32, #tpu.memory_space<vmem>>, vector<200x1xf32>
      tpu.vector_store %arg8[%c0_22, %c0_23], %25 {strides = array<i32>} : memref<200x1xf32, #tpu.memory_space<vmem>>, vector<200x1xf32>,
    } else {
    }
    %c0 = arith.constant 0 : index
    %c0_1 = arith.constant 0 : index
    %3 = vector.load %arg2[%c0, %c0_1] : memref<200x512xf32, #tpu.memory_space<vmem>>, vector<200x512xf32>
    %c0_2 = arith.constant 0 : index
    %c0_3 = arith.constant 0 : index
    %4 = vector.load %arg3[%c0_2, %c0_3] : memref<200x512xf32, #tpu.memory_space<vmem>>, vector<200x512xf32>
    %5 = arith.mulf %3, %4 : vector<200x512xf32>
    %c0_4 = arith.constant 0 : index
    %c0_5 = arith.constant 0 : index
    %6 = vector.load %arg4[%c0_4, %c0_5] : memref<200x512xf32, #tpu.memory_space<vmem>>, vector<200x512xf32>
    %7 = arith.mulf %5, %6 : vector<200x512xf32>
    %c0_6 = arith.constant 0 : index
    %c0_7 = arith.constant 0 : index
    %8 = vector.load %arg8[%c0_6, %c0_7] : memref<200x1xf32, #tpu.memory_space<vmem>>, vector<200x1xf32>
    %cst = arith.constant dense<0.000000e+00> : vector<200xf32>
    %9 = vector.multi_reduction <add>, %3, %cst [1] : vector<200x512xf32> to vector<200xf32>
    %10 = vector.shape_cast %9 : vector<200xf32> to vector<200x1xf32>
    %11 = arith.addf %8, %10 : vector<200x1xf32>
    %c0_8 = arith.constant 0 : index
    %c0_9 = arith.constant 0 : index
    %12 = vector.load %arg8[%c0_8, %c0_9] : memref<200x1xf32, #tpu.memory_space<vmem>>, vector<200x1xf32>
    tpu.vector_store %arg8[%c0_8, %c0_9], %11 {strides = array<i32>} : memref<200x1xf32, #tpu.memory_space<vmem>>, vector<200x1xf32>,
    %c0_10 = arith.constant 0 : index
    %c0_11 = arith.constant 0 : index
    %13 = vector.load %arg7[%c0_10, %c0_11] : memref<200x256xf32, #tpu.memory_space<vmem>>, vector<200x256xf32>
    %14 = arith.truncf %7 : vector<200x512xf32> to vector<200x512xbf16>
    %c0_12 = arith.constant 0 : index
    %c0_13 = arith.constant 0 : index
    %15 = vector.load %arg5[%c0_12, %c0_13] : memref<512x256xf32, #tpu.memory_space<vmem>>, vector<512x256xf32>
    %16 = arith.truncf %15 : vector<512x256xf32> to vector<512x256xbf16>
    %cst_14 = arith.constant dense<0.000000e+00> : vector<200x256xf32>
    %17 = tpu.matmul %14, %16, %cst_14 {dimension_numbers = #tpu.dot_dimension_numbers<[1], [0], [0], [1], [0, 0, 1, 1], [], []>} : vector<200x512xbf16>, vector<512x256xbf16>, vector<200x256xf32> -> vector<200x256xf32>
    %18 = arith.addf %13, %17 : vector<200x256xf32>
    %c0_15 = arith.constant 0 : index
    %c0_16 = arith.constant 0 : index
    %19 = vector.load %arg7[%c0_15, %c0_16] : memref<200x256xf32, #tpu.memory_space<vmem>>, vector<200x256xf32>
    tpu.vector_store %arg7[%c0_15, %c0_16], %18 {strides = array<i32>} : memref<200x256xf32, #tpu.memory_space<vmem>>, vector<200x256xf32>,
    %c1_i32 = arith.constant 1 : i32
    %20 = arith.cmpi eq, %arg1, %c1_i32 : i32
    %21 = arith.extui %20 : i1 to i32
    %c0_i32_17 = arith.constant 0 : i32
    %22 = arith.cmpi ne, %21, %c0_i32_17 : i32
    scf.if %22 {
      %c0_18 = arith.constant 0 : index
      %c0_19 = arith.constant 0 : index
      %23 = vector.load %arg8[%c0_18, %c0_19] : memref<200x1xf32, #tpu.memory_space<vmem>>, vector<200x1xf32>
      %cst_20 = arith.constant 1.000000e+00 : f32
      %24 = vector.broadcast %cst_20 : f32 to vector<200x1xf32>
      %25 = arith.maximumf %23, %24 : vector<200x1xf32>
      %26 = tpu.reciprocal %25 {approx = true} : vector<200x1xf32> -> vector<200x1xf32>
      %c0_21 = arith.constant 0 : index
      %c0_22 = arith.constant 0 : index
      %27 = vector.load %arg7[%c0_21, %c0_22] : memref<200x256xf32, #tpu.memory_space<vmem>>, vector<200x256xf32>
      %28 = vector.broadcast %26 : vector<200x1xf32> to vector<200x256xf32>
      %29 = arith.mulf %27, %28 : vector<200x256xf32>
      %30 = math.tanh %29 : vector<200x256xf32>
      %c0_23 = arith.constant 0 : index
      %c0_24 = arith.constant 0 : index
      %31 = vector.load %arg6[%c0_23, %c0_24] : memref<200x256xf32, #tpu.memory_space<vmem>>, vector<200x256xf32>
      tpu.vector_store %arg6[%c0_23, %c0_24], %30 {strides = array<i32>} : memref<200x256xf32, #tpu.memory_space<vmem>>, vector<200x256xf32>,
    } else {
    }
    return
  }
  func.func @transform_0(%arg0: i32, %arg1: i32) -> (i32, i32) {
    %c0_i32 = arith.constant 0 : i32
    return %arg0, %arg1 : i32, i32
  }
  func.func @transform_1(%arg0: i32, %arg1: i32) -> (i32, i32) {
    %c0_i32 = arith.constant 0 : i32
    return %arg0, %arg1 : i32, i32
  }
  func.func @transform_2(%arg0: i32, %arg1: i32) -> (i32, i32) {
    %c0_i32 = arith.constant 0 : i32
    return %arg0, %arg1 : i32, i32
  }
  func.func @transform_3(%arg0: i32, %arg1: i32) -> (i32, i32) {
    %c0_i32 = arith.constant 0 : i32
    %c0_i32_0 = arith.constant 0 : i32
    return %arg1, %c0_i32 : i32, i32
  }
  func.func @transform_4(%arg0: i32, %arg1: i32) -> (i32, i32) {
    %c0_i32 = arith.constant 0 : i32
    %c0_i32_0 = arith.constant 0 : i32
    return %arg0, %c0_i32 : i32, i32
  }
}

</mosaic_0001>

<llo_original>
// kernel: tpu_custom_call.1
$region0: #{tpu_custom_call.1}
  #allocation0 [shape = 'u32[]', space=smem, size = 0x4, offset = 0x4, fixed_abs, tag = 'smem constant byte address 0x4 - core index']
  #allocation1 [shape = 'u32[144,128]{1,0:T(1,128)}', space=vmem, size = 0x12000, scoped, tag = 'internal scratch']
  #allocation2 [shape = 'f32[200,256]{1,0:T(8,128)}', space=vmem, size = 0x32000, scoped, tag = 'scratch operand']
  #allocation3 [shape = 'f32[200,1]{1,0:T(8,128)}', space=vmem, size = 0x19000, scoped, tag = 'scratch operand']
  %s0 = inlined_call_operand.hbm [shape: f32[200,1024], index: 0, kind: input, shape index: {}]
  %s1 = inlined_call_operand.hbm [shape: f32[200,1024], index: 1, kind: input, shape index: {}]
  %s2 = inlined_call_operand.hbm [shape: f32[200,1024], index: 2, kind: input, shape index: {}]
  %s3 = inlined_call_operand.hbm [shape: f32[1024,256], index: 3, kind: input, shape index: {}]
  %s4 = inlined_call_operand.hbm [shape: f32[200,256], index: 4, kind: output, shape index: {}]
  %s5 = sld [smem:[#allocation0]]
  $region73: #{tpu_custom_call.1} parent=0
    _
  %s7 = ssub.s32 1, %s5
  %s8 = scalar_select 0, %s7, %s5
  $region1: #{tpu_custom_call.1} parent=0
    #allocation4 [shape = 'u8[819200]{0}', space=vmem, size = 0xc8000, scoped, tag = 'input window, operand 0']
    #allocation5 [shape = 's32[2]{0}', space=sflag, size = 0x8, scoped, tag = 'scoped memory for tpu_custom_call.1']
    #allocation6 [shape = 's32[2]{0}', space=sflag, size = 0x8, scoped, tag = 'scoped memory for tpu_custom_call.1']
    #allocation7 [shape = 'u8[819200]{0}', space=vmem, size = 0xc8000, scoped, tag = 'input window, operand 1']
    #allocation8 [shape = 's32[2]{0}', space=sflag, size = 0x8, scoped, tag = 'scoped memory for tpu_custom_call.1']
    #allocation9 [shape = 'u8[819200]{0}', space=vmem, size = 0xc8000, scoped, tag = 'input window, operand 2']
    #allocation10 [shape = 'u8[1048576]{0}', space=vmem, size = 0x100000, scoped, tag = 'input window, operand 3']
    #allocation11 [shape = 's32[2]{0}', space=sflag, size = 0x8, scoped, tag = 'scoped memory for tpu_custom_call.1']
    #allocation12 [shape = 'u8[204800]{0}', space=vmem, size = 0x32000, scoped, tag = 'output window, operand 0, single buffered']
    %9 = vsyncpa [#allocation5], 0
    %s10 = scalar_lea.sflag [#allocation5], 1
    %11 = vsyncpa %s10, 0
    %12 = vsyncpa [#allocation8], 0
    %s13 = scalar_lea.sflag [#allocation8], 1
    %14 = vsyncpa %s13, 0
    %15 = vsyncpa [#allocation11], 0
    %s16 = scalar_lea.sflag [#allocation11], 1
    %17 = vsyncpa %s16, 0
    %18 = vsyncpa [#allocation6], 0
    loop: start=0, step=1, limit=4
    $region2: #{tpu_custom_call.1} parent=1 // loop_pre_header
      _
    $region3: #{tpu_custom_call.1} parent=1 // loop_header
      %s20 = sphi 0, %s24
      %p21 = scmp.ge.s32.totalorder %s20, 4
      %s27 = sphi 0, %s39
      %s28 = sphi 0, %s35
      %s29 = sphi 0, %s27
      %s30 = sphi 0, %s28
      %s31 = sphi 0, %s29
      %s32 = sphi 0, %s30
      %s44 = sphi 0, %s46
      %s47 = sphi 0, %s44
      %s48 = sphi 0, %s47
      %s64 = sphi 0, %s48
      %s72 = sphi 0, %s74
      %s75 = sphi 0, %s72
      %s76 = sphi 0, %s75
      %s92 = sphi 0, %s76
      %s100 = sphi 0, %s102
      %s103 = sphi 0, %s100
      %s104 = sphi 0, %s103
      %s120 = sphi 0, %s104
      %s126 = sphi 0, %s128
      %s129 = sphi 0, %s126
      %s130 = sphi 0, %s129
      %s146 = sphi 0, %s130
      %s152 = sphi 0, %s154
      %s155 = sphi 0, %s152
      %s156 = sphi 0, %s155
      %s172 = sphi 0, %s156
    $region4: #{tpu_custom_call.1} parent=1 // loop_header_branch
      %23 = sbr.rel (%p21) target = $region8
    $region5: #{tpu_custom_call.1} parent=1 // loop_body
      %s25 = ssub.s32 %s20, 1
      %s26 = ssub.s32 %s20, 2
      %s33 = sadd.s32 1, %s28
      %p34 = scmp.ge.s32.totalorder %s33, 2
      %s35 = scalar_select %p34, 0, %s33
      %s36 = sadd.s32 1, %s27
      %s37 = scalar_select %p34, %s36, %s27
      %p38 = scmp.ge.s32.totalorder %s37, 1
      %s39 = scalar_select %p38, 0, %s37
      %s40 = ssub.s32 %s27, %s39
      %s41 = ssub.s32 %s28, %s35
      %s42 = sor.u32 %s40, %s41
      %p43 = scmp.eq.s32.totalorder %s42, 0
      %s45 = sadd.s32 %s44, 1
      %s46 = scalar_select %p43, %s44, %s45
      %p49 = pneg %p43
      %p50 = scmp.eq.s32.totalorder %s20, 1
      %p51 = por %p49, %p50
      %p52 = scmp.ne.s32.totalorder %s44, %s47
      %p53 = scmp.eq.s32.totalorder %s20, 0
      %p54 = por %p52, %p53
      %p55 = scmp.ne.s32.totalorder %s44, %s47
      %p56 = scmp.eq.s32.totalorder %s25, 1
      %p57 = por %p55, %p56
      %p58 = scmp.ne.s32.totalorder %s47, %s48
      %p59 = scmp.eq.s32.totalorder %s25, 0
      %p60 = por %p58, %p59
      %p61 = scmp.ne.s32.totalorder %s47, %s48
      %p62 = scmp.eq.s32.totalorder %s26, 1
      %p63 = por %p61, %p62
      %p65 = scmp.ne.s32.totalorder %s48, %s64
      %p66 = scmp.eq.s32.totalorder %s26, 0
      %p67 = por %p65, %p66
      %s68 = ssub.s32 %s27, %s39
      %s69 = ssub.s32 %s28, %s35
      %s70 = sor.u32 %s68, %s69
      %p71 = scmp.eq.s32.totalorder %s70, 0
      %s73 = sadd.s32 %s72, 1
      %s74 = scalar_select %p71, %s72, %s73
      %p77 = pneg %p71
      %p78 = scmp.eq.s32.totalorder %s20, 1
      %p79 = por %p77, %p78
      %p80 = scmp.ne.s32.totalorder %s72, %s75
      %p81 = scmp.eq.s32.totalorder %s20, 0
      %p82 = por %p80, %p81
      %p83 = scmp.ne.s32.totalorder %s72, %s75
      %p84 = scmp.eq.s32.totalorder %s25, 1
      %p85 = por %p83, %p84
      %p86 = scmp.ne.s32.totalorder %s75, %s76
      %p87 = scmp.eq.s32.totalorder %s25, 0
      %p88 = por %p86, %p87
      %p89 = scmp.ne.s32.totalorder %s75, %s76
      %p90 = scmp.eq.s32.totalorder %s26, 1
      %p91 = por %p89, %p90
      %p93 = scmp.ne.s32.totalorder %s76, %s92
      %p94 = scmp.eq.s32.totalorder %s26, 0
      %p95 = por %p93, %p94
      %s96 = ssub.s32 %s27, %s39
      %s97 = ssub.s32 %s28, %s35
      %s98 = sor.u32 %s96, %s97
      %p99 = scmp.eq.s32.totalorder %s98, 0
      %s101 = sadd.s32 %s100, 1
      %s102 = scalar_select %p99, %s100, %s101
      %p105 = pneg %p99
      %p106 = scmp.eq.s32.totalorder %s20, 1
      %p107 = por %p105, %p106
      %p108 = scmp.ne.s32.totalorder %s100, %s103
      %p109 = scmp.eq.s32.totalorder %s20, 0
      %p110 = por %p108, %p109
      %p111 = scmp.ne.s32.totalorder %s100, %s103
      %p112 = scmp.eq.s32.totalorder %s25, 1
      %p113 = por %p111, %p112
      %p114 = scmp.ne.s32.totalorder %s103, %s104
      %p115 = scmp.eq.s32.totalorder %s25, 0
      %p116 = por %p114, %p115
      %p117 = scmp.ne.s32.totalorder %s103, %s104
      %p118 = scmp.eq.s32.totalorder %s26, 1
      %p119 = por %p117, %p118
      %p121 = scmp.ne.s32.totalorder %s104, %s120
      %p122 = scmp.eq.s32.totalorder %s26, 0
      %p123 = por %p121, %p122
      %s124 = ssub.s32 %s28, %s35
      %p125 = scmp.eq.s32.totalorder %s124, 0
      %s127 = sadd.s32 %s126, 1
      %s128 = scalar_select %p125, %s126, %s127
      %p131 = pneg %p125
      %p132 = scmp.eq.s32.totalorder %s20, 1
      %p133 = por %p131, %p132
      %p134 = scmp.ne.s32.totalorder %s126, %s129
      %p135 = scmp.eq.s32.totalorder %s20, 0
      %p136 = por %p134, %p135
      %p137 = scmp.ne.s32.totalorder %s126, %s129
      %p138 = scmp.eq.s32.totalorder %s25, 1
      %p139 = por %p137, %p138
      %p140 = scmp.ne.s32.totalorder %s129, %s130
      %p141 = scmp.eq.s32.totalorder %s25, 0
      %p142 = por %p140, %p141
      %p143 = scmp.ne.s32.totalorder %s129, %s130
      %p144 = scmp.eq.s32.totalorder %s26, 1
      %p145 = por %p143, %p144
      %p147 = scmp.ne.s32.totalorder %s130, %s146
      %p148 = scmp.eq.s32.totalorder %s26, 0
      %p149 = por %p147, %p148
      %s150 = ssub.s32 %s27, %s39
      %p151 = scmp.eq.s32.totalorder %s150, 0
      %s153 = sadd.s32 %s152, 1
      %s154 = scalar_select %p151, %s152, %s153
      %p157 = pneg %p151
      %p158 = scmp.eq.s32.totalorder %s20, 1
      %p159 = por %p157, %p158
      %p160 = scmp.ne.s32.totalorder %s152, %s155
      %p161 = scmp.eq.s32.totalorder %s20, 0
      %p162 = por %p160, %p161
      %p163 = scmp.ne.s32.totalorder %s152, %s155
      %p164 = scmp.eq.s32.totalorder %s25, 1
      %p165 = por %p163, %p164
      %p166 = scmp.ne.s32.totalorder %s155, %s156
      %p167 = scmp.eq.s32.totalorder %s25, 0
      %p168 = por %p166, %p167
      %p169 = scmp.ne.s32.totalorder %s155, %s156
      %p170 = scmp.eq.s32.totalorder %s26, 1
      %p171 = por %p169, %p170
      %p173 = scmp.ne.s32.totalorder %s156, %s172
      %p174 = scmp.eq.s32.totalorder %s26, 0
      %p175 = por %p173, %p174
      %p176 = scmp.le.s32.totalorder 1, %s20
      %p177 = scmp.lt.s32.totalorder %s20, 3
      %p178 = pnand %p176, %p177
      %p179 = pneg %p178
      // Predicated region
      $region9: #{tpu_custom_call.1} parent=5 // pred_check
        _
      $region10: #{tpu_custom_call.1} parent=5 // pred_check_branch
        %181 = sbr.rel (%p178) target = $region12
      $region11: #{tpu_custom_call.1} parent=5 // pred_region
        %s182 = ssub.s32 %s20, 1
      $region12: #{tpu_custom_call.1} parent=5 // pred_fallthru
        _
      %p183 = scmp.lt.s32.totalorder %s20, 2
      // Predicated region
      $region13: #{tpu_custom_call.1} parent=5 // pred_check
        %p184 = pneg %p183
      $region14: #{tpu_custom_call.1} parent=5 // pred_check_branch
        %186 = sbr.rel (%p184) target = $region16
      $region15: #{tpu_custom_call.1} parent=5 // pred_region
        // Predicated region
        $region17: #{tpu_custom_call.1} parent=15 // pred_check
          %p187 = pneg %p54
        $region18: #{tpu_custom_call.1} parent=15 // pred_check_branch
          %189 = sbr.rel (%p187) target = $region20
        $region19: #{tpu_custom_call.1} parent=15 // pred_region
          %s190 = sand.u32 %s44, 1
          %s191 = scalar_lea.sflag [#allocation5], %s190
          %s192 = sand.u32 %s44, 1
          %s193 = smul.addr %s192, 800
          %s194 = scalar_lea.vmem [#allocation4], %s193
          %s195 = smul.u32 25, %s27
          %s196 = smul.u32 4, %s28
          %s198 = ssub.s32 12800, 12800
          %199 = vsyncadd %s191, %s198
          %s200 = smul.addr %s195, 8
          %s201 = sadd.s32 %s196, %s200
          %s202 = smul.addr %s201, 128
          %s203 = scalar_lea.hbm %s0, %s202
          %s204 = sshll.u32 %s194, 4
          %s205 = int_to_ptr.vmem [resolvable:$true] %s204
          %210 = dma.hbm_to_vmem [thread:$0]  %s203, 12800, %s205, %s191, 1024, 512, 32
        $region20: #{tpu_custom_call.1} parent=15 // pred_fallthru
          _
        // Predicated region
        $region21: #{tpu_custom_call.1} parent=15 // pred_check
          %p211 = pneg %p82
        $region22: #{tpu_custom_call.1} parent=15 // pred_check_branch
          %213 = sbr.rel (%p211) target = $region24
        $region23: #{tpu_custom_call.1} parent=15 // pred_region
          %s214 = sand.u32 %s20, 1
          %s215 = scalar_lea.sflag [#allocation8], %s214
          %s216 = sand.u32 %s72, 1
          %s217 = smul.addr %s216, 800
          %s218 = scalar_lea.vmem [#allocation7], %s217
          %s219 = smul.u32 25, %s27
          %s220 = smul.u32 4, %s28
          %s222 = ssub.s32 12800, 12800
          %223 = vsyncadd %s215, %s222
          %s224 = smul.addr %s219, 8
          %s225 = sadd.s32 %s220, %s224
          %s226 = smul.addr %s225, 128
          %s227 = scalar_lea.hbm %s1, %s226
          %s228 = sshll.u32 %s218, 4
          %s229 = int_to_ptr.vmem [resolvable:$true] %s228
          %234 = dma.hbm_to_vmem [thread:$0]  %s227, 12800, %s229, %s215, 1024, 512, 32
        $region24: #{tpu_custom_call.1} parent=15 // pred_fallthru
          _
        // Predicated region
        $region25: #{tpu_custom_call.1} parent=15 // pred_check
          %p235 = pneg %p110
        $region26: #{tpu_custom_call.1} parent=15 // pred_check_branch
          %237 = sbr.rel (%p235) target = $region28
        $region27: #{tpu_custom_call.1} parent=15 // pred_region
          %s238 = sand.u32 %s20, 1
          %s239 = scalar_lea.sflag [#allocation8], %s238
          %s240 = sand.u32 %s100, 1
          %s241 = smul.addr %s240, 800
          %s242 = scalar_lea.vmem [#allocation9], %s241
          %s243 = smul.u32 25, %s27
          %s244 = smul.u32 4, %s28
          %s246 = ssub.s32 12800, 12800
          %247 = vsyncadd %s239, %s246
          %s248 = smul.addr %s243, 8
          %s249 = sadd.s32 %s244, %s248
          %s250 = smul.addr %s249, 128
          %s251 = scalar_lea.hbm %s2, %s250
          %s252 = sshll.u32 %s242, 4
          %s253 = int_to_ptr.vmem [resolvable:$true] %s252
          %258 = dma.hbm_to_vmem [thread:$0]  %s251, 12800, %s253, %s239, 1024, 512, 32
        $region28: #{tpu_custom_call.1} parent=15 // pred_fallthru
          _
        // Predicated region
        $region29: #{tpu_custom_call.1} parent=15 // pred_check
          %p259 = pneg %p136
        $region30: #{tpu_custom_call.1} parent=15 // pred_check_branch
          %261 = sbr.rel (%p259) target = $region32
        $region31: #{tpu_custom_call.1} parent=15 // pred_region
          %s262 = sand.u32 %s126, 1
          %s263 = scalar_lea.sflag [#allocation11], %s262
          %s264 = sand.u32 %s126, 1
          %s265 = smul.addr %s264, 1024
          %s266 = scalar_lea.vmem [#allocation10], %s265
          %s267 = smul.u32 64, %s28
          %s269 = ssub.s32 16384, 16384
          %270 = vsyncadd %s263, %s269
          %s271 = smul.addr %s267, 2
          %s272 = smul.addr %s271, 128
          %s273 = scalar_lea.hbm %s3, %s272
          %s274 = sshll.u32 %s266, 4
          %s275 = int_to_ptr.vmem [resolvable:$true] %s274
          %280 = dma.hbm_to_vmem [thread:$0]  %s273, 16384, %s275, %s263, 256, 256, 16
        $region32: #{tpu_custom_call.1} parent=15 // pred_fallthru
          _
      $region16: #{tpu_custom_call.1} parent=5 // pred_fallthru
        _
      %p281 = scmp.le.s32.totalorder 1, %s20
      %p282 = scmp.lt.s32.totalorder %s20, 3
      %p283 = pnand %p281, %p282
      %p284 = pneg %p283
      // Predicated region
      $region33: #{tpu_custom_call.1} parent=5 // pred_check
        _
      $region34: #{tpu_custom_call.1} parent=5 // pred_check_branch
        %286 = sbr.rel (%p283) target = $region36
      $region35: #{tpu_custom_call.1} parent=5 // pred_region
        %s287 = ssub.s32 %s20, 1
        %s288 = sand.u32 %s47, 1
        %s289 = scalar_lea.sflag [#allocation5], %s288
        %s290 = sand.u32 %s47, 1
        %s291 = smul.addr %s290, 800
        %s292 = scalar_lea.vmem [#allocation4], %s291
        // Predicated region
        $region37: #{tpu_custom_call.1} parent=35 // pred_check
          %p293 = pneg %p60
        $region38: #{tpu_custom_call.1} parent=35 // pred_check_branch
          %295 = sbr.rel (%p293) target = $region40
        $region39: #{tpu_custom_call.1} parent=35 // pred_region
          %296 = dma.done %s289, 12800
        $region40: #{tpu_custom_call.1} parent=35 // pred_fallthru
          _
        %s297 = sand.u32 %s25, 1
        %s298 = scalar_lea.sflag [#allocation8], %s297
        %s299 = sand.u32 %s75, 1
        %s300 = smul.addr %s299, 800
        %s301 = scalar_lea.vmem [#allocation7], %s300
        // Predicated region
        $region41: #{tpu_custom_call.1} parent=35 // pred_check
          %p302 = pneg %p88
        $region42: #{tpu_custom_call.1} parent=35 // pred_check_branch
          %304 = sbr.rel (%p302) target = $region44
        $region43: #{tpu_custom_call.1} parent=35 // pred_region
          %305 = dma.done %s298, 12800
        $region44: #{tpu_custom_call.1} parent=35 // pred_fallthru
          _
        %s306 = sand.u32 %s25, 1
        %s307 = scalar_lea.sflag [#allocation8], %s306
        %s308 = sand.u32 %s103, 1
        %s309 = smul.addr %s308, 800
        %s310 = scalar_lea.vmem [#allocation9], %s309
        // Predicated region
        $region45: #{tpu_custom_call.1} parent=35 // pred_check
          %p311 = pneg %p116
        $region46: #{tpu_custom_call.1} parent=35 // pred_check_branch
          %313 = sbr.rel (%p311) target = $region48
        $region47: #{tpu_custom_call.1} parent=35 // pred_region
          %314 = dma.done %s307, 12800
        $region48: #{tpu_custom_call.1} parent=35 // pred_fallthru
          _
        %s315 = sand.u32 %s129, 1
        %s316 = scalar_lea.sflag [#allocation11], %s315
        %s317 = sand.u32 %s129, 1
        %s318 = smul.addr %s317, 1024
        %s319 = scalar_lea.vmem [#allocation10], %s318
        // Predicated region
        $region49: #{tpu_custom_call.1} parent=35 // pred_check
          %p320 = pneg %p142
        $region50: #{tpu_custom_call.1} parent=35 // pred_check_branch
          %322 = sbr.rel (%p320) target = $region52
        $region51: #{tpu_custom_call.1} parent=35 // pred_region
          %323 = dma.done %s316, 16384
        $region52: #{tpu_custom_call.1} parent=35 // pred_fallthru
          _
        %s324 = sand.u32 %s47, 1
        %s325 = scalar_lea.sflag [#allocation5], %s324
        %s326 = sand.u32 %s47, 1
        %s327 = smul.addr %s326, 800
        %s328 = scalar_lea.vmem [#allocation4], %s327
        %p329 = pneg %p60
        %p330 = pneg %p57
        %s331 = sand.u32 %s25, 1
        %s332 = scalar_lea.sflag [#allocation8], %s331
        %s333 = sand.u32 %s75, 1
        %s334 = smul.addr %s333, 800
        %s335 = scalar_lea.vmem [#allocation7], %s334
        %p336 = pneg %p88
        %p337 = pneg %p85
        %s338 = sand.u32 %s25, 1
        %s339 = scalar_lea.sflag [#allocation8], %s338
        %s340 = sand.u32 %s103, 1
        %s341 = smul.addr %s340, 800
        %s342 = scalar_lea.vmem [#allocation9], %s341
        %p343 = pneg %p116
        %p344 = pneg %p113
        %s345 = sand.u32 %s129, 1
        %s346 = scalar_lea.sflag [#allocation11], %s345
        %s347 = sand.u32 %s129, 1
        %s348 = smul.addr %s347, 1024
        %s349 = scalar_lea.vmem [#allocation10], %s348
        %p350 = pneg %p142
        %p351 = pneg %p139
        %p352 = pneg %p168
        %p353 = pneg %p165
        %s354 = smul.u32 25, %s29
        %s355 = smul.u32 4, %s30
        %s356 = smul.u32 25, %s29
        %s357 = smul.u32 4, %s30
        %s358 = smul.u32 25, %s29
        %s359 = smul.u32 4, %s30
        %s360 = smul.u32 64, %s30
        %s361 = smul.u32 25, %s29
        %p362 = scmp.eq.s32.totalorder %s30, 0
        // Predicated region
        $region53: #{tpu_custom_call.1} parent=35 // pred_check
          %p363 = pneg %p362
        $region54: #{tpu_custom_call.1} parent=35 // pred_check_branch
          %365 = sbr.rel (%p363) target = $region56
        $region55: #{tpu_custom_call.1} parent=35 // pred_region
          %366 = vst [vmem:[#allocation2] sm:$0xff] 0.0
          %367 = vst [vmem:[#allocation2 + $0x8] sm:$0xff] 0.0
          %368 = vst [vmem:[#allocation2 + $0x10] sm:$0xff] 0.0
          %369 = vst [vmem:[#allocation2 + $0x18] sm:$0xff] 0.0
          %370 = vst [vmem:[#allocation2 + $0x20] sm:$0xff] 0.0
          %371 = vst [vmem:[#allocation2 + $0x28] sm:$0xff] 0.0
          %372 = vst [vmem:[#allocation2 + $0x30] sm:$0xff] 0.0
          %373 = vst [vmem:[#allocation2 + $0x38] sm:$0xff] 0.0
          %374 = vst [vmem:[#allocation2 + $0x40] sm:$0xff] 0.0
          %375 = vst [vmem:[#allocation2 + $0x48] sm:$0xff] 0.0
          %376 = vst [vmem:[#allocation2 + $0x50] sm:$0xff] 0.0
          %377 = vst [vmem:[#allocation2 + $0x58] sm:$0xff] 0.0
          %378 = vst [vmem:[#allocation2 + $0x60] sm:$0xff] 0.0
          %379 = vst [vmem:[#allocation2 + $0x68] sm:$0xff] 0.0
          %380 = vst [vmem:[#allocation2 + $0x70] sm:$0xff] 0.0
          %381 = vst [vmem:[#allocation2 + $0x78] sm:$0xff] 0.0
          %382 = vst [vmem:[#allocation2 + $0x80] sm:$0xff] 0.0
          %383 = vst [vmem:[#allocation2 + $0x88] sm:$0xff] 0.0
          %384 = vst [vmem:[#allocation2 + $0x90] sm:$0xff] 0.0
          %385 = vst [vmem:[#allocation2 + $0x98] sm:$0xff] 0.0
          %386 = vst [vmem:[#allocation2 + $0xa0] sm:$0xff] 0.0
          %387 = vst [vmem:[#allocation2 + $0xa8] sm:$0xff] 0.0
          %388 = vst [vmem:[#allocation2 + $0xb0] sm:$0xff] 0.0
          %389 = vst [vmem:[#allocation2 + $0xb8] sm:$0xff] 0.0
          %390 = vst [vmem:[#allocation2 + $0xc0] sm:$0xff] 0.0
          %391 = vst [vmem:[#allocation2 + $0xc8] sm:$0xff] 0.0
          %392 = vst [vmem:[#allocation2 + $0xd0] sm:$0xff] 0.0
          %393 = vst [vmem:[#allocation2 + $0xd8] sm:$0xff] 0.0
          %394 = vst [vmem:[#allocation2 + $0xe0] sm:$0xff] 0.0
          %395 = vst [vmem:[#allocation2 + $0xe8] sm:$0xff] 0.0
          %396 = vst [vmem:[#allocation2 + $0xf0] sm:$0xff] 0.0
          %397 = vst [vmem:[#allocation2 + $0xf8] sm:$0xff] 0.0
          %398 = vst [vmem:[#allocation2 + $0x100] sm:$0xff] 0.0
          %399 = vst [vmem:[#allocation2 + $0x108] sm:$0xff] 0.0
          %400 = vst [vmem:[#allocation2 + $0x110] sm:$0xff] 0.0
          %401 = vst [vmem:[#allocation2 + $0x118] sm:$0xff] 0.0
          %402 = vst [vmem:[#allocation2 + $0x120] sm:$0xff] 0.0
          %403 = vst [vmem:[#allocation2 + $0x128] sm:$0xff] 0.0
          %404 = vst [vmem:[#allocation2 + $0x130] sm:$0xff] 0.0
          %405 = vst [vmem:[#allocation2 + $0x138] sm:$0xff] 0.0
          %406 = vst [vmem:[#allocation2 + $0x140] sm:$0xff] 0.0
          %407 = vst [vmem:[#allocation2 + $0x148] sm:$0xff] 0.0
          %408 = vst [vmem:[#allocation2 + $0x150] sm:$0xff] 0.0
          %409 = vst [vmem:[#allocation2 + $0x158] sm:$0xff] 0.0
          %410 = vst [vmem:[#allocation2 + $0x160] sm:$0xff] 0.0
          %411 = vst [vmem:[#allocation2 + $0x168] sm:$0xff] 0.0
          %412 = vst [vmem:[#allocation2 + $0x170] sm:$0xff] 0.0
          %413 = vst [vmem:[#allocation2 + $0x178] sm:$0xff] 0.0
          %414 = vst [vmem:[#allocation2 + $0x180] sm:$0xff] 0.0
          %415 = vst [vmem:[#allocation2 + $0x188] sm:$0xff] 0.0
          %vm416 = vcmask 7168
          %417 = vst.msk [vmem:[#allocation3] sm:$0xff] %vm416, 0.0
          %418 = vst.msk [vmem:[#allocation3 + $0x8] sm:$0xff] %vm416, 0.0
          %419 = vst.msk [vmem:[#allocation3 + $0x10] sm:$0xff] %vm416, 0.0
          %420 = vst.msk [vmem:[#allocation3 + $0x18] sm:$0xff] %vm416, 0.0
          %421 = vst.msk [vmem:[#allocation3 + $0x20] sm:$0xff] %vm416, 0.0
          %422 = vst.msk [vmem:[#allocation3 + $0x28] sm:$0xff] %vm416, 0.0
          %423 = vst.msk [vmem:[#allocation3 + $0x30] sm:$0xff] %vm416, 0.0
          %424 = vst.msk [vmem:[#allocation3 + $0x38] sm:$0xff] %vm416, 0.0
          %425 = vst.msk [vmem:[#allocation3 + $0x40] sm:$0xff] %vm416, 0.0
          %426 = vst.msk [vmem:[#allocation3 + $0x48] sm:$0xff] %vm416, 0.0
          %427 = vst.msk [vmem:[#allocation3 + $0x50] sm:$0xff] %vm416, 0.0
          %428 = vst.msk [vmem:[#allocation3 + $0x58] sm:$0xff] %vm416, 0.0
          %429 = vst.msk [vmem:[#allocation3 + $0x60] sm:$0xff] %vm416, 0.0
          %430 = vst.msk [vmem:[#allocation3 + $0x68] sm:$0xff] %vm416, 0.0
          %431 = vst.msk [vmem:[#allocation3 + $0x70] sm:$0xff] %vm416, 0.0
          %432 = vst.msk [vmem:[#allocation3 + $0x78] sm:$0xff] %vm416, 0.0
          %433 = vst.msk [vmem:[#allocation3 + $0x80] sm:$0xff] %vm416, 0.0
          %434 = vst.msk [vmem:[#allocation3 + $0x88] sm:$0xff] %vm416, 0.0
          %435 = vst.msk [vmem:[#allocation3 + $0x90] sm:$0xff] %vm416, 0.0
          %436 = vst.msk [vmem:[#allocation3 + $0x98] sm:$0xff] %vm416, 0.0
          %437 = vst.msk [vmem:[#allocation3 + $0xa0] sm:$0xff] %vm416, 0.0
          %438 = vst.msk [vmem:[#allocation3 + $0xa8] sm:$0xff] %vm416, 0.0
          %439 = vst.msk [vmem:[#allocation3 + $0xb0] sm:$0xff] %vm416, 0.0
          %440 = vst.msk [vmem:[#allocation3 + $0xb8] sm:$0xff] %vm416, 0.0
          %441 = vst.msk [vmem:[#allocation3 + $0xc0] sm:$0xff] %vm416, 0.0
        $region56: #{tpu_custom_call.1} parent=35 // pred_fallthru
          _
        %v442 = vld [vmem:[%s292] sm:$0xff]
        %v443 = vld [vmem:[%s292 + $0x8] sm:$0xff]
        %v444 = vld [vmem:[%s292 + $0x10] sm:$0xff]
        %v445 = vld [vmem:[%s292 + $0x18] sm:$0xff]
        %v446 = vld [vmem:[%s292 + $0x20] sm:$0xff]
        %v447 = vld [vmem:[%s292 + $0x28] sm:$0xff]
        %v448 = vld [vmem:[%s292 + $0x30] sm:$0xff]
        %v449 = vld [vmem:[%s292 + $0x38] sm:$0xff]
        %v450 = vld [vmem:[%s292 + $0x40] sm:$0xff]
        %v451 = vld [vmem:[%s292 + $0x48] sm:$0xff]
        %v452 = vld [vmem:[%s292 + $0x50] sm:$0xff]
        %v453 = vld [vmem:[%s292 + $0x58] sm:$0xff]
        %v454 = vld [vmem:[%s292 + $0x60] sm:$0xff]
        %v455 = vld [vmem:[%s292 + $0x68] sm:$0xff]
        %v456 = vld [vmem:[%s292 + $0x70] sm:$0xff]
        %v457 = vld [vmem:[%s292 + $0x78] sm:$0xff]
        %v458 = vld [vmem:[%s292 + $0x80] sm:$0xff]
        %v459 = vld [vmem:[%s292 + $0x88] sm:$0xff]
        %v460 = vld [vmem:[%s292 + $0x90] sm:$0xff]
        %v461 = vld [vmem:[%s292 + $0x98] sm:$0xff]
        %v462 = vld [vmem:[%s292 + $0xa0] sm:$0xff]
        %v463 = vld [vmem:[%s292 + $0xa8] sm:$0xff]
        %v464 = vld [vmem:[%s292 + $0xb0] sm:$0xff]
        %v465 = vld [vmem:[%s292 + $0xb8] sm:$0xff]
        %v466 = vld [vmem:[%s292 + $0xc0] sm:$0xff]
        %v467 = vld [vmem:[%s292 + $0xc8] sm:$0xff]
        %v468 = vld [vmem:[%s292 + $0xd0] sm:$0xff]
        %v469 = vld [vmem:[%s292 + $0xd8] sm:$0xff]
        %v470 = vld [vmem:[%s292 + $0xe0] sm:$0xff]
        %v471 = vld [vmem:[%s292 + $0xe8] sm:$0xff]
        %v472 = vld [vmem:[%s292 + $0xf0] sm:$0xff]
        %v473 = vld [vmem:[%s292 + $0xf8] sm:$0xff]
        %v474 = vld [vmem:[%s292 + $0x100] sm:$0xff]
        %v475 = vld [vmem:[%s292 + $0x108] sm:$0xff]
        %v476 = vld [vmem:[%s292 + $0x110] sm:$0xff]
        %v477 = vld [vmem:[%s292 + $0x118] sm:$0xff]
        %v478 = vld [vmem:[%s292 + $0x120] sm:$0xff]
        %v479 = vld [vmem:[%s292 + $0x128] sm:$0xff]
        %v480 = vld [vmem:[%s292 + $0x130] sm:$0xff]
        %v481 = vld [vmem:[%s292 + $0x138] sm:$0xff]
        %v482 = vld [vmem:[%s292 + $0x140] sm:$0xff]
        %v483 = vld [vmem:[%s292 + $0x148] sm:$0xff]
        %v484 = vld [vmem:[%s292 + $0x150] sm:$0xff]
        %v485 = vld [vmem:[%s292 + $0x158] sm:$0xff]
        %v486 = vld [vmem:[%s292 + $0x160] sm:$0xff]
        %v487 = vld [vmem:[%s292 + $0x168] sm:$0xff]
        %v488 = vld [vmem:[%s292 + $0x170] sm:$0xff]
        %v489 = vld [vmem:[%s292 + $0x178] sm:$0xff]
        %v490 = vld [vmem:[%s292 + $0x180] sm:$0xff]
        %v491 = vld [vmem:[%s292 + $0x188] sm:$0xff]
        %v492 = vld [vmem:[%s292 + $0x190] sm:$0xff]
        %v493 = vld [vmem:[%s292 + $0x198] sm:$0xff]
        %v494 = vld [vmem:[%s292 + $0x1a0] sm:$0xff]
        %v495 = vld [vmem:[%s292 + $0x1a8] sm:$0xff]
        %v496 = vld [vmem:[%s292 + $0x1b0] sm:$0xff]
        %v497 = vld [vmem:[%s292 + $0x1b8] sm:$0xff]
        %v498 = vld [vmem:[%s292 + $0x1c0] sm:$0xff]
        %v499 = vld [vmem:[%s292 + $0x1c8] sm:$0xff]
        %v500 = vld [vmem:[%s292 + $0x1d0] sm:$0xff]
        %v501 = vld [vmem:[%s292 + $0x1d8] sm:$0xff]
        %v502 = vld [vmem:[%s292 + $0x1e0] sm:$0xff]
        %v503 = vld [vmem:[%s292 + $0x1e8] sm:$0xff]
        %v504 = vld [vmem:[%s292 + $0x1f0] sm:$0xff]
        %v505 = vld [vmem:[%s292 + $0x1f8] sm:$0xff]
        %v506 = vld [vmem:[%s292 + $0x200] sm:$0xff]
        %v507 = vld [vmem:[%s292 + $0x208] sm:$0xff]
        %v508 = vld [vmem:[%s292 + $0x210] sm:$0xff]
        %v509 = vld [vmem:[%s292 + $0x218] sm:$0xff]
        %v510 = vld [vmem:[%s292 + $0x220] sm:$0xff]
        %v511 = vld [vmem:[%s292 + $0x228] sm:$0xff]
        %v512 = vld [vmem:[%s292 + $0x230] sm:$0xff]
        %v513 = vld [vmem:[%s292 + $0x238] sm:$0xff]
        %v514 = vld [vmem:[%s292 + $0x240] sm:$0xff]
        %v515 = vld [vmem:[%s292 + $0x248] sm:$0xff]
        %v516 = vld [vmem:[%s292 + $0x250] sm:$0xff]
        %v517 = vld [vmem:[%s292 + $0x258] sm:$0xff]
        %v518 = vld [vmem:[%s292 + $0x260] sm:$0xff]
        %v519 = vld [vmem:[%s292 + $0x268] sm:$0xff]
        %v520 = vld [vmem:[%s292 + $0x270] sm:$0xff]
        %v521 = vld [vmem:[%s292 + $0x278] sm:$0xff]
        %v522 = vld [vmem:[%s292 + $0x280] sm:$0xff]
        %v523 = vld [vmem:[%s292 + $0x288] sm:$0xff]
        %v524 = vld [vmem:[%s292 + $0x290] sm:$0xff]
        %v525 = vld [vmem:[%s292 + $0x298] sm:$0xff]
        %v526 = vld [vmem:[%s292 + $0x2a0] sm:$0xff]
        %v527 = vld [vmem:[%s292 + $0x2a8] sm:$0xff]
        %v528 = vld [vmem:[%s292 + $0x2b0] sm:$0xff]
        %v529 = vld [vmem:[%s292 + $0x2b8] sm:$0xff]
        %v530 = vld [vmem:[%s292 + $0x2c0] sm:$0xff]
        %v531 = vld [vmem:[%s292 + $0x2c8] sm:$0xff]
        %v532 = vld [vmem:[%s292 + $0x2d0] sm:$0xff]
        %v533 = vld [vmem:[%s292 + $0x2d8] sm:$0xff]
        %v534 = vld [vmem:[%s292 + $0x2e0] sm:$0xff]
        %v535 = vld [vmem:[%s292 + $0x2e8] sm:$0xff]
        %v536 = vld [vmem:[%s292 + $0x2f0] sm:$0xff]
        %v537 = vld [vmem:[%s292 + $0x2f8] sm:$0xff]
        %v538 = vld [vmem:[%s292 + $0x300] sm:$0xff]
        %v539 = vld [vmem:[%s292 + $0x308] sm:$0xff]
        %v540 = vld [vmem:[%s292 + $0x310] sm:$0xff]
        %v541 = vld [vmem:[%s292 + $0x318] sm:$0xff]
        %v542 = vld [vmem:[%s301] sm:$0xff]
        %v543 = vld [vmem:[%s301 + $0x8] sm:$0xff]
        %v544 = vld [vmem:[%s301 + $0x10] sm:$0xff]
        %v545 = vld [vmem:[%s301 + $0x18] sm:$0xff]
        %v546 = vld [vmem:[%s301 + $0x20] sm:$0xff]
        %v547 = vld [vmem:[%s301 + $0x28] sm:$0xff]
        %v548 = vld [vmem:[%s301 + $0x30] sm:$0xff]
        %v549 = vld [vmem:[%s301 + $0x38] sm:$0xff]
        %v550 = vld [vmem:[%s301 + $0x40] sm:$0xff]
        %v551 = vld [vmem:[%s301 + $0x48] sm:$0xff]
        %v552 = vld [vmem:[%s301 + $0x50] sm:$0xff]
        %v553 = vld [vmem:[%s301 + $0x58] sm:$0xff]
        %v554 = vld [vmem:[%s301 + $0x60] sm:$0xff]
        %v555 = vld [vmem:[%s301 + $0x68] sm:$0xff]
        %v556 = vld [vmem:[%s301 + $0x70] sm:$0xff]
        %v557 = vld [vmem:[%s301 + $0x78] sm:$0xff]
        %v558 = vld [vmem:[%s301 + $0x80] sm:$0xff]
        %v559 = vld [vmem:[%s301 + $0x88] sm:$0xff]
        %v560 = vld [vmem:[%s301 + $0x90] sm:$0xff]
        %v561 = vld [vmem:[%s301 + $0x98] sm:$0xff]
        %v562 = vld [vmem:[%s301 + $0xa0] sm:$0xff]
        %v563 = vld [vmem:[%s301 + $0xa8] sm:$0xff]
        %v564 = vld [vmem:[%s301 + $0xb0] sm:$0xff]
        %v565 = vld [vmem:[%s301 + $0xb8] sm:$0xff]
        %v566 = vld [vmem:[%s301 + $0xc0] sm:$0xff]
        %v567 = vld [vmem:[%s301 + $0xc8] sm:$0xff]
        %v568 = vld [vmem:[%s301 + $0xd0] sm:$0xff]
        %v569 = vld [vmem:[%s301 + $0xd8] sm:$0xff]
        %v570 = vld [vmem:[%s301 + $0xe0] sm:$0xff]
        %v571 = vld [vmem:[%s301 + $0xe8] sm:$0xff]
        %v572 = vld [vmem:[%s301 + $0xf0] sm:$0xff]
        %v573 = vld [vmem:[%s301 + $0xf8] sm:$0xff]
        %v574 = vld [vmem:[%s301 + $0x100] sm:$0xff]
        %v575 = vld [vmem:[%s301 + $0x108] sm:$0xff]
        %v576 = vld [vmem:[%s301 + $0x110] sm:$0xff]
        %v577 = vld [vmem:[%s301 + $0x118] sm:$0xff]
        %v578 = vld [vmem:[%s301 + $0x120] sm:$0xff]
        %v579 = vld [vmem:[%s301 + $0x128] sm:$0xff]
        %v580 = vld [vmem:[%s301 + $0x130] sm:$0xff]
        %v581 = vld [vmem:[%s301 + $0x138] sm:$0xff]
        %v582 = vld [vmem:[%s301 + $0x140] sm:$0xff]
        %v583 = vld [vmem:[%s301 + $0x148] sm:$0xff]
        %v584 = vld [vmem:[%s301 + $0x150] sm:$0xff]
        %v585 = vld [vmem:[%s301 + $0x158] sm:$0xff]
        %v586 = vld [vmem:[%s301 + $0x160] sm:$0xff]
        %v587 = vld [vmem:[%s301 + $0x168] sm:$0xff]
        %v588 = vld [vmem:[%s301 + $0x170] sm:$0xff]
        %v589 = vld [vmem:[%s301 + $0x178] sm:$0xff]
        %v590 = vld [vmem:[%s301 + $0x180] sm:$0xff]
        %v591 = vld [vmem:[%s301 + $0x188] sm:$0xff]
        %v592 = vld [vmem:[%s301 + $0x190] sm:$0xff]
        %v593 = vld [vmem:[%s301 + $0x198] sm:$0xff]
        %v594 = vld [vmem:[%s301 + $0x1a0] sm:$0xff]
        %v595 = vld [vmem:[%s301 + $0x1a8] sm:$0xff]
        %v596 = vld [vmem:[%s301 + $0x1b0] sm:$0xff]
        %v597 = vld [vmem:[%s301 + $0x1b8] sm:$0xff]
        %v598 = vld [vmem:[%s301 + $0x1c0] sm:$0xff]
        %v599 = vld [vmem:[%s301 + $0x1c8] sm:$0xff]
        %v600 = vld [vmem:[%s301 + $0x1d0] sm:$0xff]
        %v601 = vld [vmem:[%s301 + $0x1d8] sm:$0xff]
        %v602 = vld [vmem:[%s301 + $0x1e0] sm:$0xff]
        %v603 = vld [vmem:[%s301 + $0x1e8] sm:$0xff]
        %v604 = vld [vmem:[%s301 + $0x1f0] sm:$0xff]
        %v605 = vld [vmem:[%s301 + $0x1f8] sm:$0xff]
        %v606 = vld [vmem:[%s301 + $0x200] sm:$0xff]
        %v607 = vld [vmem:[%s301 + $0x208] sm:$0xff]
        %v608 = vld [vmem:[%s301 + $0x210] sm:$0xff]
        %v609 = vld [vmem:[%s301 + $0x218] sm:$0xff]
        %v610 = vld [vmem:[%s301 + $0x220] sm:$0xff]
        %v611 = vld [vmem:[%s301 + $0x228] sm:$0xff]
        %v612 = vld [vmem:[%s301 + $0x230] sm:$0xff]
        %v613 = vld [vmem:[%s301 + $0x238] sm:$0xff]
        %v614 = vld [vmem:[%s301 + $0x240] sm:$0xff]
        %v615 = vld [vmem:[%s301 + $0x248] sm:$0xff]
        %v616 = vld [vmem:[%s301 + $0x250] sm:$0xff]
        %v617 = vld [vmem:[%s301 + $0x258] sm:$0xff]
        %v618 = vld [vmem:[%s301 + $0x260] sm:$0xff]
        %v619 = vld [vmem:[%s301 + $0x268] sm:$0xff]
        %v620 = vld [vmem:[%s301 + $0x270] sm:$0xff]
        %v621 = vld [vmem:[%s301 + $0x278] sm:$0xff]
        %v622 = vld [vmem:[%s301 + $0x280] sm:$0xff]
        %v623 = vld [vmem:[%s301 + $0x288] sm:$0xff]
        %v624 = vld [vmem:[%s301 + $0x290] sm:$0xff]
        %v625 = vld [vmem:[%s301 + $0x298] sm:$0xff]
        %v626 = vld [vmem:[%s301 + $0x2a0] sm:$0xff]
        %v627 = vld [vmem:[%s301 + $0x2a8] sm:$0xff]
        %v628 = vld [vmem:[%s301 + $0x2b0] sm:$0xff]
        %v629 = vld [vmem:[%s301 + $0x2b8] sm:$0xff]
        %v630 = vld [vmem:[%s301 + $0x2c0] sm:$0xff]
        %v631 = vld [vmem:[%s301 + $0x2c8] sm:$0xff]
        %v632 = vld [vmem:[%s301 + $0x2d0] sm:$0xff]
        %v633 = vld [vmem:[%s301 + $0x2d8] sm:$0xff]
        %v634 = vld [vmem:[%s301 + $0x2e0] sm:$0xff]
        %v635 = vld [vmem:[%s301 + $0x2e8] sm:$0xff]
        %v636 = vld [vmem:[%s301 + $0x2f0] sm:$0xff]
        %v637 = vld [vmem:[%s301 + $0x2f8] sm:$0xff]
        %v638 = vld [vmem:[%s301 + $0x300] sm:$0xff]
        %v639 = vld [vmem:[%s301 + $0x308] sm:$0xff]
        %v640 = vld [vmem:[%s301 + $0x310] sm:$0xff]
        %v641 = vld [vmem:[%s301 + $0x318] sm:$0xff]
        %v642 = vmul.f32 %v442, %v542
        %v643 = vmul.f32 %v443, %v543
        %v644 = vmul.f32 %v444, %v544
        %v645 = vmul.f32 %v445, %v545
        %v646 = vmul.f32 %v446, %v546
        %v647 = vmul.f32 %v447, %v547
        %v648 = vmul.f32 %v448, %v548
        %v649 = vmul.f32 %v449, %v549
        %v650 = vmul.f32 %v450, %v550
        %v651 = vmul.f32 %v451, %v551
        %v652 = vmul.f32 %v452, %v552
        %v653 = vmul.f32 %v453, %v553
        %v654 = vmul.f32 %v454, %v554
        %v655 = vmul.f32 %v455, %v555
        %v656 = vmul.f32 %v456, %v556
        %v657 = vmul.f32 %v457, %v557
        %v658 = vmul.f32 %v458, %v558
        %v659 = vmul.f32 %v459, %v559
        %v660 = vmul.f32 %v460, %v560
        %v661 = vmul.f32 %v461, %v561
        %v662 = vmul.f32 %v462, %v562
        %v663 = vmul.f32 %v463, %v563
        %v664 = vmul.f32 %v464, %v564
        %v665 = vmul.f32 %v465, %v565
        %v666 = vmul.f32 %v466, %v566
        %v667 = vmul.f32 %v467, %v567
        %v668 = vmul.f32 %v468, %v568
        %v669 = vmul.f32 %v469, %v569
        %v670 = vmul.f32 %v470, %v570
        %v671 = vmul.f32 %v471, %v571
        %v672 = vmul.f32 %v472, %v572
        %v673 = vmul.f32 %v473, %v573
        %v674 = vmul.f32 %v474, %v574
        %v675 = vmul.f32 %v475, %v575
        %v676 = vmul.f32 %v476, %v576
        %v677 = vmul.f32 %v477, %v577
        %v678 = vmul.f32 %v478, %v578
        %v679 = vmul.f32 %v479, %v579
        %v680 = vmul.f32 %v480, %v580
        %v681 = vmul.f32 %v481, %v581
        %v682 = vmul.f32 %v482, %v582
        %v683 = vmul.f32 %v483, %v583
        %v684 = vmul.f32 %v484, %v584
        %v685 = vmul.f32 %v485, %v585
        %v686 = vmul.f32 %v486, %v586
        %v687 = vmul.f32 %v487, %v587
        %v688 = vmul.f32 %v488, %v588
        %v689 = vmul.f32 %v489, %v589
        %v690 = vmul.f32 %v490, %v590
        %v691 = vmul.f32 %v491, %v591
        %v692 = vmul.f32 %v492, %v592
        %v693 = vmul.f32 %v493, %v593
        %v694 = vmul.f32 %v494, %v594
        %v695 = vmul.f32 %v495, %v595
        %v696 = vmul.f32 %v496, %v596
        %v697 = vmul.f32 %v497, %v597
        %v698 = vmul.f32 %v498, %v598
        %v699 = vmul.f32 %v499, %v599
        %v700 = vmul.f32 %v500, %v600
        %v701 = vmul.f32 %v501, %v601
        %v702 = vmul.f32 %v502, %v602
        %v703 = vmul.f32 %v503, %v603
        %v704 = vmul.f32 %v504, %v604
        %v705 = vmul.f32 %v505, %v605
        %v706 = vmul.f32 %v506, %v606
        %v707 = vmul.f32 %v507, %v607
        %v708 = vmul.f32 %v508, %v608
        %v709 = vmul.f32 %v509, %v609
        %v710 = vmul.f32 %v510, %v610
        %v711 = vmul.f32 %v511, %v611
        %v712 = vmul.f32 %v512, %v612
        %v713 = vmul.f32 %v513, %v613
        %v714 = vmul.f32 %v514, %v614
        %v715 = vmul.f32 %v515, %v615
        %v716 = vmul.f32 %v516, %v616
        %v717 = vmul.f32 %v517, %v617
        %v718 = vmul.f32 %v518, %v618
        %v719 = vmul.f32 %v519, %v619
        %v720 = vmul.f32 %v520, %v620
        %v721 = vmul.f32 %v521, %v621
        %v722 = vmul.f32 %v522, %v622
        %v723 = vmul.f32 %v523, %v623
        %v724 = vmul.f32 %v524, %v624
        %v725 = vmul.f32 %v525, %v625
        %v726 = vmul.f32 %v526, %v626
        %v727 = vmul.f32 %v527, %v627
        %v728 = vmul.f32 %v528, %v628
        %v729 = vmul.f32 %v529, %v629
        %v730 = vmul.f32 %v530, %v630
        %v731 = vmul.f32 %v531, %v631
        %v732 = vmul.f32 %v532, %v632
        %v733 = vmul.f32 %v533, %v633
        %v734 = vmul.f32 %v534, %v634
        %v735 = vmul.f32 %v535, %v635
        %v736 = vmul.f32 %v536, %v636
        %v737 = vmul.f32 %v537, %v637
        %v738 = vmul.f32 %v538, %v638
        %v739 = vmul.f32 %v539, %v639
        %v740 = vmul.f32 %v540, %v640
        %v741 = vmul.f32 %v541, %v641
        %v742 = vld [vmem:[%s310] sm:$0xff]
        %v743 = vld [vmem:[%s310 + $0x8] sm:$0xff]
        %v744 = vld [vmem:[%s310 + $0x10] sm:$0xff]
        %v745 = vld [vmem:[%s310 + $0x18] sm:$0xff]
        %v746 = vld [vmem:[%s310 + $0x20] sm:$0xff]
        %v747 = vld [vmem:[%s310 + $0x28] sm:$0xff]
        %v748 = vld [vmem:[%s310 + $0x30] sm:$0xff]
        %v749 = vld [vmem:[%s310 + $0x38] sm:$0xff]
        %v750 = vld [vmem:[%s310 + $0x40] sm:$0xff]
        %v751 = vld [vmem:[%s310 + $0x48] sm:$0xff]
        %v752 = vld [vmem:[%s310 + $0x50] sm:$0xff]
        %v753 = vld [vmem:[%s310 + $0x58] sm:$0xff]
        %v754 = vld [vmem:[%s310 + $0x60] sm:$0xff]
        %v755 = vld [vmem:[%s310 + $0x68] sm:$0xff]
        %v756 = vld [vmem:[%s310 + $0x70] sm:$0xff]
        %v757 = vld [vmem:[%s310 + $0x78] sm:$0xff]
        %v758 = vld [vmem:[%s310 + $0x80] sm:$0xff]
        %v759 = vld [vmem:[%s310 + $0x88] sm:$0xff]
        %v760 = vld [vmem:[%s310 + $0x90] sm:$0xff]
        %v761 = vld [vmem:[%s310 + $0x98] sm:$0xff]
        %v762 = vld [vmem:[%s310 + $0xa0] sm:$0xff]
        %v763 = vld [vmem:[%s310 + $0xa8] sm:$0xff]
        %v764 = vld [vmem:[%s310 + $0xb0] sm:$0xff]
        %v765 = vld [vmem:[%s310 + $0xb8] sm:$0xff]
        %v766 = vld [vmem:[%s310 + $0xc0] sm:$0xff]
        %v767 = vld [vmem:[%s310 + $0xc8] sm:$0xff]
        %v768 = vld [vmem:[%s310 + $0xd0] sm:$0xff]
        %v769 = vld [vmem:[%s310 + $0xd8] sm:$0xff]
        %v770 = vld [vmem:[%s310 + $0xe0] sm:$0xff]
        %v771 = vld [vmem:[%s310 + $0xe8] sm:$0xff]
        %v772 = vld [vmem:[%s310 + $0xf0] sm:$0xff]
        %v773 = vld [vmem:[%s310 + $0xf8] sm:$0xff]
        %v774 = vld [vmem:[%s310 + $0x100] sm:$0xff]
        %v775 = vld [vmem:[%s310 + $0x108] sm:$0xff]
        %v776 = vld [vmem:[%s310 + $0x110] sm:$0xff]
        %v777 = vld [vmem:[%s310 + $0x118] sm:$0xff]
        %v778 = vld [vmem:[%s310 + $0x120] sm:$0xff]
        %v779 = vld [vmem:[%s310 + $0x128] sm:$0xff]
        %v780 = vld [vmem:[%s310 + $0x130] sm:$0xff]
        %v781 = vld [vmem:[%s310 + $0x138] sm:$0xff]
        %v782 = vld [vmem:[%s310 + $0x140] sm:$0xff]
        %v783 = vld [vmem:[%s310 + $0x148] sm:$0xff]
        %v784 = vld [vmem:[%s310 + $0x150] sm:$0xff]
        %v785 = vld [vmem:[%s310 + $0x158] sm:$0xff]
        %v786 = vld [vmem:[%s310 + $0x160] sm:$0xff]
        %v787 = vld [vmem:[%s310 + $0x168] sm:$0xff]
        %v788 = vld [vmem:[%s310 + $0x170] sm:$0xff]
        %v789 = vld [vmem:[%s310 + $0x178] sm:$0xff]
        %v790 = vld [vmem:[%s310 + $0x180] sm:$0xff]
        %v791 = vld [vmem:[%s310 + $0x188] sm:$0xff]
        %v792 = vld [vmem:[%s310 + $0x190] sm:$0xff]
        %v793 = vld [vmem:[%s310 + $0x198] sm:$0xff]
        %v794 = vld [vmem:[%s310 + $0x1a0] sm:$0xff]
        %v795 = vld [vmem:[%s310 + $0x1a8] sm:$0xff]
        %v796 = vld [vmem:[%s310 + $0x1b0] sm:$0xff]
        %v797 = vld [vmem:[%s310 + $0x1b8] sm:$0xff]
        %v798 = vld [vmem:[%s310 + $0x1c0] sm:$0xff]
        %v799 = vld [vmem:[%s310 + $0x1c8] sm:$0xff]
        %v800 = vld [vmem:[%s310 + $0x1d0] sm:$0xff]
        %v801 = vld [vmem:[%s310 + $0x1d8] sm:$0xff]
        %v802 = vld [vmem:[%s310 + $0x1e0] sm:$0xff]
        %v803 = vld [vmem:[%s310 + $0x1e8] sm:$0xff]
        %v804 = vld [vmem:[%s310 + $0x1f0] sm:$0xff]
        %v805 = vld [vmem:[%s310 + $0x1f8] sm:$0xff]
        %v806 = vld [vmem:[%s310 + $0x200] sm:$0xff]
        %v807 = vld [vmem:[%s310 + $0x208] sm:$0xff]
        %v808 = vld [vmem:[%s310 + $0x210] sm:$0xff]
        %v809 = vld [vmem:[%s310 + $0x218] sm:$0xff]
        %v810 = vld [vmem:[%s310 + $0x220] sm:$0xff]
        %v811 = vld [vmem:[%s310 + $0x228] sm:$0xff]
        %v812 = vld [vmem:[%s310 + $0x230] sm:$0xff]
        %v813 = vld [vmem:[%s310 + $0x238] sm:$0xff]
        %v814 = vld [vmem:[%s310 + $0x240] sm:$0xff]
        %v815 = vld [vmem:[%s310 + $0x248] sm:$0xff]
        %v816 = vld [vmem:[%s310 + $0x250] sm:$0xff]
        %v817 = vld [vmem:[%s310 + $0x258] sm:$0xff]
        %v818 = vld [vmem:[%s310 + $0x260] sm:$0xff]
        %v819 = vld [vmem:[%s310 + $0x268] sm:$0xff]
        %v820 = vld [vmem:[%s310 + $0x270] sm:$0xff]
        %v821 = vld [vmem:[%s310 + $0x278] sm:$0xff]
        %v822 = vld [vmem:[%s310 + $0x280] sm:$0xff]
        %v823 = vld [vmem:[%s310 + $0x288] sm:$0xff]
        %v824 = vld [vmem:[%s310 + $0x290] sm:$0xff]
        %v825 = vld [vmem:[%s310 + $0x298] sm:$0xff]
        %v826 = vld [vmem:[%s310 + $0x2a0] sm:$0xff]
        %v827 = vld [vmem:[%s310 + $0x2a8] sm:$0xff]
        %v828 = vld [vmem:[%s310 + $0x2b0] sm:$0xff]
        %v829 = vld [vmem:[%s310 + $0x2b8] sm:$0xff]
        %v830 = vld [vmem:[%s310 + $0x2c0] sm:$0xff]
        %v831 = vld [vmem:[%s310 + $0x2c8] sm:$0xff]
        %v832 = vld [vmem:[%s310 + $0x2d0] sm:$0xff]
        %v833 = vld [vmem:[%s310 + $0x2d8] sm:$0xff]
        %v834 = vld [vmem:[%s310 + $0x2e0] sm:$0xff]
        %v835 = vld [vmem:[%s310 + $0x2e8] sm:$0xff]
        %v836 = vld [vmem:[%s310 + $0x2f0] sm:$0xff]
        %v837 = vld [vmem:[%s310 + $0x2f8] sm:$0xff]
        %v838 = vld [vmem:[%s310 + $0x300] sm:$0xff]
        %v839 = vld [vmem:[%s310 + $0x308] sm:$0xff]
        %v840 = vld [vmem:[%s310 + $0x310] sm:$0xff]
        %v841 = vld [vmem:[%s310 + $0x318] sm:$0xff]
        %v842 = vmul.f32 %v642, %v742
        %v843 = vmul.f32 %v643, %v743
        %v844 = vmul.f32 %v644, %v744
        %v845 = vmul.f32 %v645, %v745
        %v846 = vmul.f32 %v646, %v746
        %v847 = vmul.f32 %v647, %v747
        %v848 = vmul.f32 %v648, %v748
        %v849 = vmul.f32 %v649, %v749
        %v850 = vmul.f32 %v650, %v750
        %v851 = vmul.f32 %v651, %v751
        %v852 = vmul.f32 %v652, %v752
        %v853 = vmul.f32 %v653, %v753
        %v854 = vmul.f32 %v654, %v754
        %v855 = vmul.f32 %v655, %v755
        %v856 = vmul.f32 %v656, %v756
        %v857 = vmul.f32 %v657, %v757
        %v858 = vmul.f32 %v658, %v758
        %v859 = vmul.f32 %v659, %v759
        %v860 = vmul.f32 %v660, %v760
        %v861 = vmul.f32 %v661, %v761
        %v862 = vmul.f32 %v662, %v762
        %v863 = vmul.f32 %v663, %v763
        %v864 = vmul.f32 %v664, %v764
        %v865 = vmul.f32 %v665, %v765
        %v866 = vmul.f32 %v666, %v766
        %v867 = vmul.f32 %v667, %v767
        %v868 = vmul.f32 %v668, %v768
        %v869 = vmul.f32 %v669, %v769
        %v870 = vmul.f32 %v670, %v770
        %v871 = vmul.f32 %v671, %v771
        %v872 = vmul.f32 %v672, %v772
        %v873 = vmul.f32 %v673, %v773
        %v874 = vmul.f32 %v674, %v774
        %v875 = vmul.f32 %v675, %v775
        %v876 = vmul.f32 %v676, %v776
        %v877 = vmul.f32 %v677, %v777
        %v878 = vmul.f32 %v678, %v778
        %v879 = vmul.f32 %v679, %v779
        %v880 = vmul.f32 %v680, %v780
        %v881 = vmul.f32 %v681, %v781
        %v882 = vmul.f32 %v682, %v782
        %v883 = vmul.f32 %v683, %v783
        %v884 = vmul.f32 %v684, %v784
        %v885 = vmul.f32 %v685, %v785
        %v886 = vmul.f32 %v686, %v786
        %v887 = vmul.f32 %v687, %v787
        %v888 = vmul.f32 %v688, %v788
        %v889 = vmul.f32 %v689, %v789
        %v890 = vmul.f32 %v690, %v790
        %v891 = vmul.f32 %v691, %v791
        %v892 = vmul.f32 %v692, %v792
        %v893 = vmul.f32 %v693, %v793
        %v894 = vmul.f32 %v694, %v794
        %v895 = vmul.f32 %v695, %v795
        %v896 = vmul.f32 %v696, %v796
        %v897 = vmul.f32 %v697, %v797
        %v898 = vmul.f32 %v698, %v798
        %v899 = vmul.f32 %v699, %v799
        %v900 = vmul.f32 %v700, %v800
        %v901 = vmul.f32 %v701, %v801
        %v902 = vmul.f32 %v702, %v802
        %v903 = vmul.f32 %v703, %v803
        %v904 = vmul.f32 %v704, %v804
        %v905 = vmul.f32 %v705, %v805
        %v906 = vmul.f32 %v706, %v806
        %v907 = vmul.f32 %v707, %v807
        %v908 = vmul.f32 %v708, %v808
        %v909 = vmul.f32 %v709, %v809
        %v910 = vmul.f32 %v710, %v810
        %v911 = vmul.f32 %v711, %v811
        %v912 = vmul.f32 %v712, %v812
        %v913 = vmul.f32 %v713, %v813
        %v914 = vmul.f32 %v714, %v814
        %v915 = vmul.f32 %v715, %v815
        %v916 = vmul.f32 %v716, %v816
        %v917 = vmul.f32 %v717, %v817
        %v918 = vmul.f32 %v718, %v818
        %v919 = vmul.f32 %v719, %v819
        %v920 = vmul.f32 %v720, %v820
        %v921 = vmul.f32 %v721, %v821
        %v922 = vmul.f32 %v722, %v822
        %v923 = vmul.f32 %v723, %v823
        %v924 = vmul.f32 %v724, %v824
        %v925 = vmul.f32 %v725, %v825
        %v926 = vmul.f32 %v726, %v826
        %v927 = vmul.f32 %v727, %v827
        %v928 = vmul.f32 %v728, %v828
        %v929 = vmul.f32 %v729, %v829
        %v930 = vmul.f32 %v730, %v830
        %v931 = vmul.f32 %v731, %v831
        %v932 = vmul.f32 %v732, %v832
        %v933 = vmul.f32 %v733, %v833
        %v934 = vmul.f32 %v734, %v834
        %v935 = vmul.f32 %v735, %v835
        %v936 = vmul.f32 %v736, %v836
        %v937 = vmul.f32 %v737, %v837
        %v938 = vmul.f32 %v738, %v838
        %v939 = vmul.f32 %v739, %v839
        %v940 = vmul.f32 %v740, %v840
        %v941 = vmul.f32 %v741, %v841
        %v942 = vld [vmem:[#allocation3] sm:$0xff]
        %v943 = vld [vmem:[#allocation3 + $0x8] sm:$0xff]
        %v944 = vld [vmem:[#allocation3 + $0x10] sm:$0xff]
        %v945 = vld [vmem:[#allocation3 + $0x18] sm:$0xff]
        %v946 = vld [vmem:[#allocation3 + $0x20] sm:$0xff]
        %v947 = vld [vmem:[#allocation3 + $0x28] sm:$0xff]
        %v948 = vld [vmem:[#allocation3 + $0x30] sm:$0xff]
        %v949 = vld [vmem:[#allocation3 + $0x38] sm:$0xff]
        %v950 = vld [vmem:[#allocation3 + $0x40] sm:$0xff]
        %v951 = vld [vmem:[#allocation3 + $0x48] sm:$0xff]
        %v952 = vld [vmem:[#allocation3 + $0x50] sm:$0xff]
        %v953 = vld [vmem:[#allocation3 + $0x58] sm:$0xff]
        %v954 = vld [vmem:[#allocation3 + $0x60] sm:$0xff]
        %v955 = vld [vmem:[#allocation3 + $0x68] sm:$0xff]
        %v956 = vld [vmem:[#allocation3 + $0x70] sm:$0xff]
        %v957 = vld [vmem:[#allocation3 + $0x78] sm:$0xff]
        %v958 = vld [vmem:[#allocation3 + $0x80] sm:$0xff]
        %v959 = vld [vmem:[#allocation3 + $0x88] sm:$0xff]
        %v960 = vld [vmem:[#allocation3 + $0x90] sm:$0xff]
        %v961 = vld [vmem:[#allocation3 + $0x98] sm:$0xff]
        %v962 = vld [vmem:[#allocation3 + $0xa0] sm:$0xff]
        %v963 = vld [vmem:[#allocation3 + $0xa8] sm:$0xff]
        %v964 = vld [vmem:[#allocation3 + $0xb0] sm:$0xff]
        %v965 = vld [vmem:[#allocation3 + $0xb8] sm:$0xff]
        %v966 = vld [vmem:[#allocation3 + $0xc0] sm:$0xff]
        %v967 = vadd.f32 %v442, %v443
        %v968 = vadd.f32 %v967, %v444
        %v969 = vadd.f32 %v968, %v445
        %970 = vadd.xlane.f32.xlu0 %v969
        %v971 = vpop.xlane.xlu0 %970
        %v972 = vadd.f32 %v446, %v447
        %v973 = vadd.f32 %v972, %v448
        %v974 = vadd.f32 %v973, %v449
        %975 = vadd.xlane.f32.xlu0 %v974
        %v976 = vpop.xlane.xlu0 %975
        %v977 = vadd.f32 %v450, %v451
        %v978 = vadd.f32 %v977, %v452
        %v979 = vadd.f32 %v978, %v453
        %980 = vadd.xlane.f32.xlu0 %v979
        %v981 = vpop.xlane.xlu0 %980
        %v982 = vadd.f32 %v454, %v455
        %v983 = vadd.f32 %v982, %v456
        %v984 = vadd.f32 %v983, %v457
        %985 = vadd.xlane.f32.xlu0 %v984
        %v986 = vpop.xlane.xlu0 %985
        %v987 = vadd.f32 %v458, %v459
        %v988 = vadd.f32 %v987, %v460
        %v989 = vadd.f32 %v988, %v461
        %990 = vadd.xlane.f32.xlu0 %v989
        %v991 = vpop.xlane.xlu0 %990
        %v992 = vadd.f32 %v462, %v463
        %v993 = vadd.f32 %v992, %v464
        %v994 = vadd.f32 %v993, %v465
        %995 = vadd.xlane.f32.xlu0 %v994
        %v996 = vpop.xlane.xlu0 %995
        %v997 = vadd.f32 %v466, %v467
        %v998 = vadd.f32 %v997, %v468
        %v999 = vadd.f32 %v998, %v469
        %1000 = vadd.xlane.f32.xlu0 %v999
        %v1001 = vpop.xlane.xlu0 %1000
        %v1002 = vadd.f32 %v470, %v471
        %v1003 = vadd.f32 %v1002, %v472
        %v1004 = vadd.f32 %v1003, %v473
        %1005 = vadd.xlane.f32.xlu0 %v1004
        %v1006 = vpop.xlane.xlu0 %1005
        %v1007 = vadd.f32 %v474, %v475
        %v1008 = vadd.f32 %v1007, %v476
        %v1009 = vadd.f32 %v1008, %v477
        %1010 = vadd.xlane.f32.xlu0 %v1009
        %v1011 = vpop.xlane.xlu0 %1010
        %v1012 = vadd.f32 %v478, %v479
        %v1013 = vadd.f32 %v1012, %v480
        %v1014 = vadd.f32 %v1013, %v481
        %1015 = vadd.xlane.f32.xlu0 %v1014
        %v1016 = vpop.xlane.xlu0 %1015
        %v1017 = vadd.f32 %v482, %v483
        %v1018 = vadd.f32 %v1017, %v484
        %v1019 = vadd.f32 %v1018, %v485
        %1020 = vadd.xlane.f32.xlu0 %v1019
        %v1021 = vpop.xlane.xlu0 %1020
        %v1022 = vadd.f32 %v486, %v487
        %v1023 = vadd.f32 %v1022, %v488
        %v1024 = vadd.f32 %v1023, %v489
        %1025 = vadd.xlane.f32.xlu0 %v1024
        %v1026 = vpop.xlane.xlu0 %1025
        %v1027 = vadd.f32 %v490, %v491
        %v1028 = vadd.f32 %v1027, %v492
        %v1029 = vadd.f32 %v1028, %v493
        %1030 = vadd.xlane.f32.xlu0 %v1029
        %v1031 = vpop.xlane.xlu0 %1030
        %v1032 = vadd.f32 %v494, %v495
        %v1033 = vadd.f32 %v1032, %v496
        %v1034 = vadd.f32 %v1033, %v497
        %1035 = vadd.xlane.f32.xlu0 %v1034
        %v1036 = vpop.xlane.xlu0 %1035
        %v1037 = vadd.f32 %v498, %v499
        %v1038 = vadd.f32 %v1037, %v500
        %v1039 = vadd.f32 %v1038, %v501
        %1040 = vadd.xlane.f32.xlu0 %v1039
        %v1041 = vpop.xlane.xlu0 %1040
        %v1042 = vadd.f32 %v502, %v503
        %v1043 = vadd.f32 %v1042, %v504
        %v1044 = vadd.f32 %v1043, %v505
        %1045 = vadd.xlane.f32.xlu0 %v1044
        %v1046 = vpop.xlane.xlu0 %1045
        %v1047 = vadd.f32 %v506, %v507
        %v1048 = vadd.f32 %v1047, %v508
        %v1049 = vadd.f32 %v1048, %v509
        %1050 = vadd.xlane.f32.xlu0 %v1049
        %v1051 = vpop.xlane.xlu0 %1050
        %v1052 = vadd.f32 %v510, %v511
        %v1053 = vadd.f32 %v1052, %v512
        %v1054 = vadd.f32 %v1053, %v513
        %1055 = vadd.xlane.f32.xlu0 %v1054
        %v1056 = vpop.xlane.xlu0 %1055
        %v1057 = vadd.f32 %v514, %v515
        %v1058 = vadd.f32 %v1057, %v516
        %v1059 = vadd.f32 %v1058, %v517
        %1060 = vadd.xlane.f32.xlu0 %v1059
        %v1061 = vpop.xlane.xlu0 %1060
        %v1062 = vadd.f32 %v518, %v519
        %v1063 = vadd.f32 %v1062, %v520
        %v1064 = vadd.f32 %v1063, %v521
        %1065 = vadd.xlane.f32.xlu0 %v1064
        %v1066 = vpop.xlane.xlu0 %1065
        %v1067 = vadd.f32 %v522, %v523
        %v1068 = vadd.f32 %v1067, %v524
        %v1069 = vadd.f32 %v1068, %v525
        %1070 = vadd.xlane.f32.xlu0 %v1069
        %v1071 = vpop.xlane.xlu0 %1070
        %v1072 = vadd.f32 %v526, %v527
        %v1073 = vadd.f32 %v1072, %v528
        %v1074 = vadd.f32 %v1073, %v529
        %1075 = vadd.xlane.f32.xlu0 %v1074
        %v1076 = vpop.xlane.xlu0 %1075
        %v1077 = vadd.f32 %v530, %v531
        %v1078 = vadd.f32 %v1077, %v532
        %v1079 = vadd.f32 %v1078, %v533
        %1080 = vadd.xlane.f32.xlu0 %v1079
        %v1081 = vpop.xlane.xlu0 %1080
        %v1082 = vadd.f32 %v534, %v535
        %v1083 = vadd.f32 %v1082, %v536
        %v1084 = vadd.f32 %v1083, %v537
        %1085 = vadd.xlane.f32.xlu0 %v1084
        %v1086 = vpop.xlane.xlu0 %1085
        %v1087 = vadd.f32 %v538, %v539
        %v1088 = vadd.f32 %v1087, %v540
        %v1089 = vadd.f32 %v1088, %v541
        %1090 = vadd.xlane.f32.xlu0 %v1089
        %v1091 = vpop.xlane.xlu0 %1090
        %v1092 = vadd.f32 %v942, %v971
        %v1093 = vadd.f32 %v943, %v976
        %v1094 = vadd.f32 %v944, %v981
        %v1095 = vadd.f32 %v945, %v986
        %v1096 = vadd.f32 %v946, %v991
        %v1097 = vadd.f32 %v947, %v996
        %v1098 = vadd.f32 %v948, %v1001
        %v1099 = vadd.f32 %v949, %v1006
        %v1100 = vadd.f32 %v950, %v1011
        %v1101 = vadd.f32 %v951, %v1016
        %v1102 = vadd.f32 %v952, %v1021
        %v1103 = vadd.f32 %v953, %v1026
        %v1104 = vadd.f32 %v954, %v1031
        %v1105 = vadd.f32 %v955, %v1036
        %v1106 = vadd.f32 %v956, %v1041
        %v1107 = vadd.f32 %v957, %v1046
        %v1108 = vadd.f32 %v958, %v1051
        %v1109 = vadd.f32 %v959, %v1056
        %v1110 = vadd.f32 %v960, %v1061
        %v1111 = vadd.f32 %v961, %v1066
        %v1112 = vadd.f32 %v962, %v1071
        %v1113 = vadd.f32 %v963, %v1076
        %v1114 = vadd.f32 %v964, %v1081
        %v1115 = vadd.f32 %v965, %v1086
        %v1116 = vadd.f32 %v966, %v1091
        %vm1117 = vcmask 7168
        %1118 = vst.msk [vmem:[#allocation3] sm:$0xff] %vm1117, %v1092
        %1119 = vst.msk [vmem:[#allocation3 + $0x8] sm:$0xff] %vm1117, %v1093
        %1120 = vst.msk [vmem:[#allocation3 + $0x10] sm:$0xff] %vm1117, %v1094
        %1121 = vst.msk [vmem:[#allocation3 + $0x18] sm:$0xff] %vm1117, %v1095
        %1122 = vst.msk [vmem:[#allocation3 + $0x20] sm:$0xff] %vm1117, %v1096
        %1123 = vst.msk [vmem:[#allocation3 + $0x28] sm:$0xff] %vm1117, %v1097
        %1124 = vst.msk [vmem:[#allocation3 + $0x30] sm:$0xff] %vm1117, %v1098
        %1125 = vst.msk [vmem:[#allocation3 + $0x38] sm:$0xff] %vm1117, %v1099
        %1126 = vst.msk [vmem:[#allocation3 + $0x40] sm:$0xff] %vm1117, %v1100
        %1127 = vst.msk [vmem:[#allocation3 + $0x48] sm:$0xff] %vm1117, %v1101
        %1128 = vst.msk [vmem:[#allocation3 + $0x50] sm:$0xff] %vm1117, %v1102
        %1129 = vst.msk [vmem:[#allocation3 + $0x58] sm:$0xff] %vm1117, %v1103
        %1130 = vst.msk [vmem:[#allocation3 + $0x60] sm:$0xff] %vm1117, %v1104
        %1131 = vst.msk [vmem:[#allocation3 + $0x68] sm:$0xff] %vm1117, %v1105
        %1132 = vst.msk [vmem:[#allocation3 + $0x70] sm:$0xff] %vm1117, %v1106
        %1133 = vst.msk [vmem:[#allocation3 + $0x78] sm:$0xff] %vm1117, %v1107
        %1134 = vst.msk [vmem:[#allocation3 + $0x80] sm:$0xff] %vm1117, %v1108
        %1135 = vst.msk [vmem:[#allocation3 + $0x88] sm:$0xff] %vm1117, %v1109
        %1136 = vst.msk [vmem:[#allocation3 + $0x90] sm:$0xff] %vm1117, %v1110
        %1137 = vst.msk [vmem:[#allocation3 + $0x98] sm:$0xff] %vm1117, %v1111
        %1138 = vst.msk [vmem:[#allocation3 + $0xa0] sm:$0xff] %vm1117, %v1112
        %1139 = vst.msk [vmem:[#allocation3 + $0xa8] sm:$0xff] %vm1117, %v1113
        %1140 = vst.msk [vmem:[#allocation3 + $0xb0] sm:$0xff] %vm1117, %v1114
        %1141 = vst.msk [vmem:[#allocation3 + $0xb8] sm:$0xff] %vm1117, %v1115
        %1142 = vst.msk [vmem:[#allocation3 + $0xc0] sm:$0xff] %vm1117, %v1116
        %v1143 = vld [vmem:[#allocation2] sm:$0xff]
        %v1144 = vld [vmem:[#allocation2 + $0x8] sm:$0xff]
        %v1145 = vld [vmem:[#allocation2 + $0x10] sm:$0xff]
        %v1146 = vld [vmem:[#allocation2 + $0x18] sm:$0xff]
        %v1147 = vld [vmem:[#allocation2 + $0x20] sm:$0xff]
        %v1148 = vld [vmem:[#allocation2 + $0x28] sm:$0xff]
        %v1149 = vld [vmem:[#allocation2 + $0x30] sm:$0xff]
        %v1150 = vld [vmem:[#allocation2 + $0x38] sm:$0xff]
        %v1151 = vld [vmem:[#allocation2 + $0x40] sm:$0xff]
        %v1152 = vld [vmem:[#allocation2 + $0x48] sm:$0xff]
        %v1153 = vld [vmem:[#allocation2 + $0x50] sm:$0xff]
        %v1154 = vld [vmem:[#allocation2 + $0x58] sm:$0xff]
        %v1155 = vld [vmem:[#allocation2 + $0x60] sm:$0xff]
        %v1156 = vld [vmem:[#allocation2 + $0x68] sm:$0xff]
        %v1157 = vld [vmem:[#allocation2 + $0x70] sm:$0xff]
        %v1158 = vld [vmem:[#allocation2 + $0x78] sm:$0xff]
        %v1159 = vld [vmem:[#allocation2 + $0x80] sm:$0xff]
        %v1160 = vld [vmem:[#allocation2 + $0x88] sm:$0xff]
        %v1161 = vld [vmem:[#allocation2 + $0x90] sm:$0xff]
        %v1162 = vld [vmem:[#allocation2 + $0x98] sm:$0xff]
        %v1163 = vld [vmem:[#allocation2 + $0xa0] sm:$0xff]
        %v1164 = vld [vmem:[#allocation2 + $0xa8] sm:$0xff]
        %v1165 = vld [vmem:[#allocation2 + $0xb0] sm:$0xff]
        %v1166 = vld [vmem:[#allocation2 + $0xb8] sm:$0xff]
        %v1167 = vld [vmem:[#allocation2 + $0xc0] sm:$0xff]
        %v1168 = vld [vmem:[#allocation2 + $0xc8] sm:$0xff]
        %v1169 = vld [vmem:[#allocation2 + $0xd0] sm:$0xff]
        %v1170 = vld [vmem:[#allocation2 + $0xd8] sm:$0xff]
        %v1171 = vld [vmem:[#allocation2 + $0xe0] sm:$0xff]
        %v1172 = vld [vmem:[#allocation2 + $0xe8] sm:$0xff]
        %v1173 = vld [vmem:[#allocation2 + $0xf0] sm:$0xff]
        %v1174 = vld [vmem:[#allocation2 + $0xf8] sm:$0xff]
        %v1175 = vld [vmem:[#allocation2 + $0x100] sm:$0xff]
        %v1176 = vld [vmem:[#allocation2 + $0x108] sm:$0xff]
        %v1177 = vld [vmem:[#allocation2 + $0x110] sm:$0xff]
        %v1178 = vld [vmem:[#allocation2 + $0x118] sm:$0xff]
        %v1179 = vld [vmem:[#allocation2 + $0x120] sm:$0xff]
        %v1180 = vld [vmem:[#allocation2 + $0x128] sm:$0xff]
        %v1181 = vld [vmem:[#allocation2 + $0x130] sm:$0xff]
        %v1182 = vld [vmem:[#allocation2 + $0x138] sm:$0xff]
        %v1183 = vld [vmem:[#allocation2 + $0x140] sm:$0xff]
        %v1184 = vld [vmem:[#allocation2 + $0x148] sm:$0xff]
        %v1185 = vld [vmem:[#allocation2 + $0x150] sm:$0xff]
        %v1186 = vld [vmem:[#allocation2 + $0x158] sm:$0xff]
        %v1187 = vld [vmem:[#allocation2 + $0x160] sm:$0xff]
        %v1188 = vld [vmem:[#allocation2 + $0x168] sm:$0xff]
        %v1189 = vld [vmem:[#allocation2 + $0x170] sm:$0xff]
        %v1190 = vld [vmem:[#allocation2 + $0x178] sm:$0xff]
        %v1191 = vld [vmem:[#allocation2 + $0x180] sm:$0xff]
        %v1192 = vld [vmem:[#allocation2 + $0x188] sm:$0xff]
        %v1193 = vpack.c.bf16 %v846, %v842
        %v1194 = vpack.c.bf16 %v847, %v843
        %v1195 = vpack.c.bf16 %v848, %v844
        %v1196 = vpack.c.bf16 %v849, %v845
        %v1197 = vpack.c.bf16 %v854, %v850
        %v1198 = vpack.c.bf16 %v855, %v851
        %v1199 = vpack.c.bf16 %v856, %v852
        %v1200 = vpack.c.bf16 %v857, %v853
        %v1201 = vpack.c.bf16 %v862, %v858
        %v1202 = vpack.c.bf16 %v863, %v859
        %v1203 = vpack.c.bf16 %v864, %v860
        %v1204 = vpack.c.bf16 %v865, %v861
        %v1205 = vpack.c.bf16 %v870, %v866
        %v1206 = vpack.c.bf16 %v871, %v867
        %v1207 = vpack.c.bf16 %v872, %v868
        %v1208 = vpack.c.bf16 %v873, %v869
        %v1209 = vpack.c.bf16 %v878, %v874
        %v1210 = vpack.c.bf16 %v879, %v875
        %v1211 = vpack.c.bf16 %v880, %v876
        %v1212 = vpack.c.bf16 %v881, %v877
        %v1213 = vpack.c.bf16 %v886, %v882
        %v1214 = vpack.c.bf16 %v887, %v883
        %v1215 = vpack.c.bf16 %v888, %v884
        %v1216 = vpack.c.bf16 %v889, %v885
        %v1217 = vpack.c.bf16 %v894, %v890
        %v1218 = vpack.c.bf16 %v895, %v891
        %v1219 = vpack.c.bf16 %v896, %v892
        %v1220 = vpack.c.bf16 %v897, %v893
        %v1221 = vpack.c.bf16 %v902, %v898
        %v1222 = vpack.c.bf16 %v903, %v899
        %v1223 = vpack.c.bf16 %v904, %v900
        %v1224 = vpack.c.bf16 %v905, %v901
        %v1225 = vpack.c.bf16 %v910, %v906
        %v1226 = vpack.c.bf16 %v911, %v907
        %v1227 = vpack.c.bf16 %v912, %v908
        %v1228 = vpack.c.bf16 %v913, %v909
        %v1229 = vpack.c.bf16 %v918, %v914
        %v1230 = vpack.c.bf16 %v919, %v915
        %v1231 = vpack.c.bf16 %v920, %v916
        %v1232 = vpack.c.bf16 %v921, %v917
        %v1233 = vpack.c.bf16 %v926, %v922
        %v1234 = vpack.c.bf16 %v927, %v923
        %v1235 = vpack.c.bf16 %v928, %v924
        %v1236 = vpack.c.bf16 %v929, %v925
        %v1237 = vpack.c.bf16 %v934, %v930
        %v1238 = vpack.c.bf16 %v935, %v931
        %v1239 = vpack.c.bf16 %v936, %v932
        %v1240 = vpack.c.bf16 %v937, %v933
        %v1241 = vpack.c.bf16 %v938, %v938
        %v1242 = vpack.c.bf16 %v939, %v939
        %v1243 = vpack.c.bf16 %v940, %v940
        %v1244 = vpack.c.bf16 %v941, %v941
        %v1245 = vld [vmem:[%s319] sm:$0xff]
        %v1246 = vld [vmem:[%s319 + $0x8] sm:$0xff]
        %v1247 = vld [vmem:[%s319 + $0x10] sm:$0xff]
        %v1248 = vld [vmem:[%s319 + $0x18] sm:$0xff]
        %v1249 = vld [vmem:[%s319 + $0x20] sm:$0xff]
        %v1250 = vld [vmem:[%s319 + $0x28] sm:$0xff]
        %v1251 = vld [vmem:[%s319 + $0x30] sm:$0xff]
        %v1252 = vld [vmem:[%s319 + $0x38] sm:$0xff]
        %v1253 = vld [vmem:[%s319 + $0x40] sm:$0xff]
        %v1254 = vld [vmem:[%s319 + $0x48] sm:$0xff]
        %v1255 = vld [vmem:[%s319 + $0x50] sm:$0xff]
        %v1256 = vld [vmem:[%s319 + $0x58] sm:$0xff]
        %v1257 = vld [vmem:[%s319 + $0x60] sm:$0xff]
        %v1258 = vld [vmem:[%s319 + $0x68] sm:$0xff]
        %v1259 = vld [vmem:[%s319 + $0x70] sm:$0xff]
        %v1260 = vld [vmem:[%s319 + $0x78] sm:$0xff]
        %v1261 = vld [vmem:[%s319 + $0x80] sm:$0xff]
        %v1262 = vld [vmem:[%s319 + $0x88] sm:$0xff]
        %v1263 = vld [vmem:[%s319 + $0x90] sm:$0xff]
        %v1264 = vld [vmem:[%s319 + $0x98] sm:$0xff]
        %v1265 = vld [vmem:[%s319 + $0xa0] sm:$0xff]
        %v1266 = vld [vmem:[%s319 + $0xa8] sm:$0xff]
        %v1267 = vld [vmem:[%s319 + $0xb0] sm:$0xff]
        %v1268 = vld [vmem:[%s319 + $0xb8] sm:$0xff]
        %v1269 = vld [vmem:[%s319 + $0xc0] sm:$0xff]
        %v1270 = vld [vmem:[%s319 + $0xc8] sm:$0xff]
        %v1271 = vld [vmem:[%s319 + $0xd0] sm:$0xff]
        %v1272 = vld [vmem:[%s319 + $0xd8] sm:$0xff]
        %v1273 = vld [vmem:[%s319 + $0xe0] sm:$0xff]
        %v1274 = vld [vmem:[%s319 + $0xe8] sm:$0xff]
        %v1275 = vld [vmem:[%s319 + $0xf0] sm:$0xff]
        %v1276 = vld [vmem:[%s319 + $0xf8] sm:$0xff]
        %v1277 = vld [vmem:[%s319 + $0x100] sm:$0xff]
        %v1278 = vld [vmem:[%s319 + $0x108] sm:$0xff]
        %v1279 = vld [vmem:[%s319 + $0x110] sm:$0xff]
        %v1280 = vld [vmem:[%s319 + $0x118] sm:$0xff]
        %v1281 = vld [vmem:[%s319 + $0x120] sm:$0xff]
        %v1282 = vld [vmem:[%s319 + $0x128] sm:$0xff]
        %v1283 = vld [vmem:[%s319 + $0x130] sm:$0xff]
        %v1284 = vld [vmem:[%s319 + $0x138] sm:$0xff]
        %v1285 = vld [vmem:[%s319 + $0x140] sm:$0xff]
        %v1286 = vld [vmem:[%s319 + $0x148] sm:$0xff]
        %v1287 = vld [vmem:[%s319 + $0x150] sm:$0xff]
        %v1288 = vld [vmem:[%s319 + $0x158] sm:$0xff]
        %v1289 = vld [vmem:[%s319 + $0x160] sm:$0xff]
        %v1290 = vld [vmem:[%s319 + $0x168] sm:$0xff]
        %v1291 = vld [vmem:[%s319 + $0x170] sm:$0xff]
        %v1292 = vld [vmem:[%s319 + $0x178] sm:$0xff]
        %v1293 = vld [vmem:[%s319 + $0x180] sm:$0xff]
        %v1294 = vld [vmem:[%s319 + $0x188] sm:$0xff]
        %v1295 = vld [vmem:[%s319 + $0x190] sm:$0xff]
        %v1296 = vld [vmem:[%s319 + $0x198] sm:$0xff]
        %v1297 = vld [vmem:[%s319 + $0x1a0] sm:$0xff]
        %v1298 = vld [vmem:[%s319 + $0x1a8] sm:$0xff]
        %v1299 = vld [vmem:[%s319 + $0x1b0] sm:$0xff]
        %v1300 = vld [vmem:[%s319 + $0x1b8] sm:$0xff]
        %v1301 = vld [vmem:[%s319 + $0x1c0] sm:$0xff]
        %v1302 = vld [vmem:[%s319 + $0x1c8] sm:$0xff]
        %v1303 = vld [vmem:[%s319 + $0x1d0] sm:$0xff]
        %v1304 = vld [vmem:[%s319 + $0x1d8] sm:$0xff]
        %v1305 = vld [vmem:[%s319 + $0x1e0] sm:$0xff]
        %v1306 = vld [vmem:[%s319 + $0x1e8] sm:$0xff]
        %v1307 = vld [vmem:[%s319 + $0x1f0] sm:$0xff]
        %v1308 = vld [vmem:[%s319 + $0x1f8] sm:$0xff]
        %v1309 = vld [vmem:[%s319 + $0x200] sm:$0xff]
        %v1310 = vld [vmem:[%s319 + $0x208] sm:$0xff]
        %v1311 = vld [vmem:[%s319 + $0x210] sm:$0xff]
        %v1312 = vld [vmem:[%s319 + $0x218] sm:$0xff]
        %v1313 = vld [vmem:[%s319 + $0x220] sm:$0xff]
        %v1314 = vld [vmem:[%s319 + $0x228] sm:$0xff]
        %v1315 = vld [vmem:[%s319 + $0x230] sm:$0xff]
        %v1316 = vld [vmem:[%s319 + $0x238] sm:$0xff]
        %v1317 = vld [vmem:[%s319 + $0x240] sm:$0xff]
        %v1318 = vld [vmem:[%s319 + $0x248] sm:$0xff]
        %v1319 = vld [vmem:[%s319 + $0x250] sm:$0xff]
        %v1320 = vld [vmem:[%s319 + $0x258] sm:$0xff]
        %v1321 = vld [vmem:[%s319 + $0x260] sm:$0xff]
        %v1322 = vld [vmem:[%s319 + $0x268] sm:$0xff]
        %v1323 = vld [vmem:[%s319 + $0x270] sm:$0xff]
        %v1324 = vld [vmem:[%s319 + $0x278] sm:$0xff]
        %v1325 = vld [vmem:[%s319 + $0x280] sm:$0xff]
        %v1326 = vld [vmem:[%s319 + $0x288] sm:$0xff]
        %v1327 = vld [vmem:[%s319 + $0x290] sm:$0xff]
        %v1328 = vld [vmem:[%s319 + $0x298] sm:$0xff]
        %v1329 = vld [vmem:[%s319 + $0x2a0] sm:$0xff]
        %v1330 = vld [vmem:[%s319 + $0x2a8] sm:$0xff]
        %v1331 = vld [vmem:[%s319 + $0x2b0] sm:$0xff]
        %v1332 = vld [vmem:[%s319 + $0x2b8] sm:$0xff]
        %v1333 = vld [vmem:[%s319 + $0x2c0] sm:$0xff]
        %v1334 = vld [vmem:[%s319 + $0x2c8] sm:$0xff]
        %v1335 = vld [vmem:[%s319 + $0x2d0] sm:$0xff]
        %v1336 = vld [vmem:[%s319 + $0x2d8] sm:$0xff]
        %v1337 = vld [vmem:[%s319 + $0x2e0] sm:$0xff]
        %v1338 = vld [vmem:[%s319 + $0x2e8] sm:$0xff]
        %v1339 = vld [vmem:[%s319 + $0x2f0] sm:$0xff]
        %v1340 = vld [vmem:[%s319 + $0x2f8] sm:$0xff]
        %v1341 = vld [vmem:[%s319 + $0x300] sm:$0xff]
        %v1342 = vld [vmem:[%s319 + $0x308] sm:$0xff]
        %v1343 = vld [vmem:[%s319 + $0x310] sm:$0xff]
        %v1344 = vld [vmem:[%s319 + $0x318] sm:$0xff]
        %v1345 = vld [vmem:[%s319 + $0x320] sm:$0xff]
        %v1346 = vld [vmem:[%s319 + $0x328] sm:$0xff]
        %v1347 = vld [vmem:[%s319 + $0x330] sm:$0xff]
        %v1348 = vld [vmem:[%s319 + $0x338] sm:$0xff]
        %v1349 = vld [vmem:[%s319 + $0x340] sm:$0xff]
        %v1350 = vld [vmem:[%s319 + $0x348] sm:$0xff]
        %v1351 = vld [vmem:[%s319 + $0x350] sm:$0xff]
        %v1352 = vld [vmem:[%s319 + $0x358] sm:$0xff]
        %v1353 = vld [vmem:[%s319 + $0x360] sm:$0xff]
        %v1354 = vld [vmem:[%s319 + $0x368] sm:$0xff]
        %v1355 = vld [vmem:[%s319 + $0x370] sm:$0xff]
        %v1356 = vld [vmem:[%s319 + $0x378] sm:$0xff]
        %v1357 = vld [vmem:[%s319 + $0x380] sm:$0xff]
        %v1358 = vld [vmem:[%s319 + $0x388] sm:$0xff]
        %v1359 = vld [vmem:[%s319 + $0x390] sm:$0xff]
        %v1360 = vld [vmem:[%s319 + $0x398] sm:$0xff]
        %v1361 = vld [vmem:[%s319 + $0x3a0] sm:$0xff]
        %v1362 = vld [vmem:[%s319 + $0x3a8] sm:$0xff]
        %v1363 = vld [vmem:[%s319 + $0x3b0] sm:$0xff]
        %v1364 = vld [vmem:[%s319 + $0x3b8] sm:$0xff]
        %v1365 = vld [vmem:[%s319 + $0x3c0] sm:$0xff]
        %v1366 = vld [vmem:[%s319 + $0x3c8] sm:$0xff]
        %v1367 = vld [vmem:[%s319 + $0x3d0] sm:$0xff]
        %v1368 = vld [vmem:[%s319 + $0x3d8] sm:$0xff]
        %v1369 = vld [vmem:[%s319 + $0x3e0] sm:$0xff]
        %v1370 = vld [vmem:[%s319 + $0x3e8] sm:$0xff]
        %v1371 = vld [vmem:[%s319 + $0x3f0] sm:$0xff]
        %v1372 = vld [vmem:[%s319 + $0x3f8] sm:$0xff]
        %v1373 = vpack.c.bf16 %v1247, %v1245
        %v1374 = vpack.c.bf16 %v1248, %v1246
        %v1375 = vpack.c.bf16 %v1251, %v1249
        %v1376 = vpack.c.bf16 %v1252, %v1250
        %v1377 = vpack.c.bf16 %v1255, %v1253
        %v1378 = vpack.c.bf16 %v1256, %v1254
        %v1379 = vpack.c.bf16 %v1259, %v1257
        %v1380 = vpack.c.bf16 %v1260, %v1258
        %v1381 = vpack.c.bf16 %v1263, %v1261
        %v1382 = vpack.c.bf16 %v1264, %v1262
        %v1383 = vpack.c.bf16 %v1267, %v1265
        %v1384 = vpack.c.bf16 %v1268, %v1266
        %v1385 = vpack.c.bf16 %v1271, %v1269
        %v1386 = vpack.c.bf16 %v1272, %v1270
        %v1387 = vpack.c.bf16 %v1275, %v1273
        %v1388 = vpack.c.bf16 %v1276, %v1274
        %v1389 = vpack.c.bf16 %v1279, %v1277
        %v1390 = vpack.c.bf16 %v1280, %v1278
        %v1391 = vpack.c.bf16 %v1283, %v1281
        %v1392 = vpack.c.bf16 %v1284, %v1282
        %v1393 = vpack.c.bf16 %v1287, %v1285
        %v1394 = vpack.c.bf16 %v1288, %v1286
        %v1395 = vpack.c.bf16 %v1291, %v1289
        %v1396 = vpack.c.bf16 %v1292, %v1290
        %v1397 = vpack.c.bf16 %v1295, %v1293
        %v1398 = vpack.c.bf16 %v1296, %v1294
        %v1399 = vpack.c.bf16 %v1299, %v1297
        %v1400 = vpack.c.bf16 %v1300, %v1298
        %v1401 = vpack.c.bf16 %v1303, %v1301
        %v1402 = vpack.c.bf16 %v1304, %v1302
        %v1403 = vpack.c.bf16 %v1307, %v1305
        %v1404 = vpack.c.bf16 %v1308, %v1306
        %v1405 = vpack.c.bf16 %v1311, %v1309
        %v1406 = vpack.c.bf16 %v1312, %v1310
        %v1407 = vpack.c.bf16 %v1315, %v1313
        %v1408 = vpack.c.bf16 %v1316, %v1314
        %v1409 = vpack.c.bf16 %v1319, %v1317
        %v1410 = vpack.c.bf16 %v1320, %v1318
        %v1411 = vpack.c.bf16 %v1323, %v1321
        %v1412 = vpack.c.bf16 %v1324, %v1322
        %v1413 = vpack.c.bf16 %v1327, %v1325
        %v1414 = vpack.c.bf16 %v1328, %v1326
        %v1415 = vpack.c.bf16 %v1331, %v1329
        %v1416 = vpack.c.bf16 %v1332, %v1330
        %v1417 = vpack.c.bf16 %v1335, %v1333
        %v1418 = vpack.c.bf16 %v1336, %v1334
        %v1419 = vpack.c.bf16 %v1339, %v1337
        %v1420 = vpack.c.bf16 %v1340, %v1338
        %v1421 = vpack.c.bf16 %v1343, %v1341
        %v1422 = vpack.c.bf16 %v1344, %v1342
        %v1423 = vpack.c.bf16 %v1347, %v1345
        %v1424 = vpack.c.bf16 %v1348, %v1346
        %v1425 = vpack.c.bf16 %v1351, %v1349
        %v1426 = vpack.c.bf16 %v1352, %v1350
        %v1427 = vpack.c.bf16 %v1355, %v1353
        %v1428 = vpack.c.bf16 %v1356, %v1354
        %v1429 = vpack.c.bf16 %v1359, %v1357
        %v1430 = vpack.c.bf16 %v1360, %v1358
        %v1431 = vpack.c.bf16 %v1363, %v1361
        %v1432 = vpack.c.bf16 %v1364, %v1362
        %v1433 = vpack.c.bf16 %v1367, %v1365
        %v1434 = vpack.c.bf16 %v1368, %v1366
        %v1435 = vpack.c.bf16 %v1371, %v1369
        %v1436 = vpack.c.bf16 %v1372, %v1370
        %1437 = vmatprep.subr.bf16.mxu0 %v1388
        %1438 = vmatpush1.bf16.msra.mxu0 %v1387
        %1439 = vmatprep.subr.bf16.mxu0 %v1386
        %1440 = vmatpush1.bf16.msra.mxu0 %v1385
        %1441 = vmatprep.subr.bf16.mxu0 %v1384
        %1442 = vmatpush1.bf16.msra.mxu0 %v1383
        %1443 = vmatprep.subr.bf16.mxu0 %v1382
        %1444 = vmatpush1.bf16.msra.mxu0 %v1381
        %1445 = vmatprep.subr.bf16.mxu0 %v1380
        %1446 = vmatpush1.bf16.msra.mxu0 %v1379
        %1447 = vmatprep.subr.bf16.mxu0 %v1378
        %1448 = vmatpush1.bf16.msra.mxu0 %v1377
        %1449 = vmatprep.subr.bf16.mxu0 %v1376
        %1450 = vmatpush1.bf16.msra.mxu0 %v1375
        %1451 = vmatprep.subr.bf16.mxu0 %v1374
        %1452 = vmatpush1.bf16.msra.mxu0 %v1373
        %1453 = vmatprep.subr.bf16.mxu0 %v1404
        %1454 = vmatpush2.bf16.msra.mxu0 %v1403
        %1455 = vmatprep.subr.bf16.mxu0 %v1402
        %1456 = vmatpush2.bf16.msra.mxu0 %v1401
        %1457 = vmatprep.subr.bf16.mxu0 %v1400
        %1458 = vmatpush2.bf16.msra.mxu0 %v1399
        %1459 = vmatprep.subr.bf16.mxu0 %v1398
        %1460 = vmatpush2.bf16.msra.mxu0 %v1397
        %1461 = vmatprep.subr.bf16.mxu0 %v1396
        %1462 = vmatpush2.bf16.msra.mxu0 %v1395
        %1463 = vmatprep.subr.bf16.mxu0 %v1394
        %1464 = vmatpush2.bf16.msra.mxu0 %v1393
        %1465 = vmatprep.subr.bf16.mxu0 %v1392
        %1466 = vmatpush2.bf16.msra.mxu0 %v1391
        %1467 = vmatprep.subr.bf16.mxu0 %v1390
        %1468 = vmatpush2.bf16.msra.mxu0 %v1389
        %1469 = vmatprep.mubr.bf16.mxu0 %v1194
        %1470 = vmatmul.mubr.bf16.gmra.mxu0 %v1193
        %v1471 = vpop.f32.mrf.mxu0
        %v1472 = vadd.f32 0.0, %v1471
        %v1473 = vpop.f32.mrf.mxu0
        %v1474 = vadd.f32 0.0, %v1473
        %v1475 = vpop.f32.mrf.mxu0
        %v1476 = vadd.f32 0.0, %v1475
        %v1477 = vpop.f32.mrf.mxu0
        %v1478 = vadd.f32 0.0, %v1477
        %1479 = vmatprep.mubr.bf16.mxu0 %v1198
        %1480 = vmatmul.mubr.bf16.gmra.mxu0 %v1197
        %v1481 = vpop.f32.mrf.mxu0
        %v1482 = vadd.f32 0.0, %v1481
        %v1483 = vpop.f32.mrf.mxu0
        %v1484 = vadd.f32 0.0, %v1483
        %v1485 = vpop.f32.mrf.mxu0
        %v1486 = vadd.f32 0.0, %v1485
        %v1487 = vpop.f32.mrf.mxu0
        %v1488 = vadd.f32 0.0, %v1487
        %1489 = vmatprep.mubr.bf16.mxu0 %v1202
        %1490 = vmatmul.mubr.bf16.gmra.mxu0 %v1201
        %v1491 = vpop.f32.mrf.mxu0
        %v1492 = vadd.f32 0.0, %v1491
        %v1493 = vpop.f32.mrf.mxu0
        %v1494 = vadd.f32 0.0, %v1493
        %v1495 = vpop.f32.mrf.mxu0
        %v1496 = vadd.f32 0.0, %v1495
        %v1497 = vpop.f32.mrf.mxu0
        %v1498 = vadd.f32 0.0, %v1497
        %1499 = vmatprep.mubr.bf16.mxu0 %v1206
        %1500 = vmatmul.mubr.bf16.gmra.mxu0 %v1205
        %v1501 = vpop.f32.mrf.mxu0
        %v1502 = vadd.f32 0.0, %v1501
        %v1503 = vpop.f32.mrf.mxu0
        %v1504 = vadd.f32 0.0, %v1503
        %v1505 = vpop.f32.mrf.mxu0
        %v1506 = vadd.f32 0.0, %v1505
        %v1507 = vpop.f32.mrf.mxu0
        %v1508 = vadd.f32 0.0, %v1507
        %1509 = vmatprep.mubr.bf16.mxu0 %v1210
        %1510 = vmatmul.mubr.bf16.gmra.mxu0 %v1209
        %v1511 = vpop.f32.mrf.mxu0
        %v1512 = vadd.f32 0.0, %v1511
        %v1513 = vpop.f32.mrf.mxu0
        %v1514 = vadd.f32 0.0, %v1513
        %v1515 = vpop.f32.mrf.mxu0
        %v1516 = vadd.f32 0.0, %v1515
        %v1517 = vpop.f32.mrf.mxu0
        %v1518 = vadd.f32 0.0, %v1517
        %1519 = vmatprep.mubr.bf16.mxu0 %v1214
        %1520 = vmatmul.mubr.bf16.gmra.mxu0 %v1213
        %v1521 = vpop.f32.mrf.mxu0
        %v1522 = vadd.f32 0.0, %v1521
        %v1523 = vpop.f32.mrf.mxu0
        %v1524 = vadd.f32 0.0, %v1523
        %v1525 = vpop.f32.mrf.mxu0
        %v1526 = vadd.f32 0.0, %v1525
        %v1527 = vpop.f32.mrf.mxu0
        %v1528 = vadd.f32 0.0, %v1527
        %1529 = vmatprep.mubr.bf16.mxu0 %v1218
        %1530 = vmatmul.mubr.bf16.gmra.mxu0 %v1217
        %v1531 = vpop.f32.mrf.mxu0
        %v1532 = vadd.f32 0.0, %v1531
        %v1533 = vpop.f32.mrf.mxu0
        %v1534 = vadd.f32 0.0, %v1533
        %v1535 = vpop.f32.mrf.mxu0
        %v1536 = vadd.f32 0.0, %v1535
        %v1537 = vpop.f32.mrf.mxu0
        %v1538 = vadd.f32 0.0, %v1537
        %1539 = vmatprep.mubr.bf16.mxu0 %v1222
        %1540 = vmatmul.mubr.bf16.gmra.mxu0 %v1221
        %v1541 = vpop.f32.mrf.mxu0
        %v1542 = vadd.f32 0.0, %v1541
        %v1543 = vpop.f32.mrf.mxu0
        %v1544 = vadd.f32 0.0, %v1543
        %v1545 = vpop.f32.mrf.mxu0
        %v1546 = vadd.f32 0.0, %v1545
        %v1547 = vpop.f32.mrf.mxu0
        %v1548 = vadd.f32 0.0, %v1547
        %1549 = vmatprep.mubr.bf16.mxu0 %v1226
        %1550 = vmatmul.mubr.bf16.gmra.mxu0 %v1225
        %v1551 = vpop.f32.mrf.mxu0
        %v1552 = vadd.f32 0.0, %v1551
        %v1553 = vpop.f32.mrf.mxu0
        %v1554 = vadd.f32 0.0, %v1553
        %v1555 = vpop.f32.mrf.mxu0
        %v1556 = vadd.f32 0.0, %v1555
        %v1557 = vpop.f32.mrf.mxu0
        %v1558 = vadd.f32 0.0, %v1557
        %1559 = vmatprep.mubr.bf16.mxu0 %v1230
        %1560 = vmatmul.mubr.bf16.gmra.mxu0 %v1229
        %v1561 = vpop.f32.mrf.mxu0
        %v1562 = vadd.f32 0.0, %v1561
        %v1563 = vpop.f32.mrf.mxu0
        %v1564 = vadd.f32 0.0, %v1563
        %v1565 = vpop.f32.mrf.mxu0
        %v1566 = vadd.f32 0.0, %v1565
        %v1567 = vpop.f32.mrf.mxu0
        %v1568 = vadd.f32 0.0, %v1567
        %1569 = vmatprep.mubr.bf16.mxu0 %v1234
        %1570 = vmatmul.mubr.bf16.gmra.mxu0 %v1233
        %v1571 = vpop.f32.mrf.mxu0
        %v1572 = vadd.f32 0.0, %v1571
        %v1573 = vpop.f32.mrf.mxu0
        %v1574 = vadd.f32 0.0, %v1573
        %v1575 = vpop.f32.mrf.mxu0
        %v1576 = vadd.f32 0.0, %v1575
        %v1577 = vpop.f32.mrf.mxu0
        %v1578 = vadd.f32 0.0, %v1577
        %1579 = vmatprep.mubr.bf16.mxu0 %v1238
        %1580 = vmatmul.mubr.bf16.gmra.mxu0 %v1237
        %v1581 = vpop.f32.mrf.mxu0
        %v1582 = vadd.f32 0.0, %v1581
        %v1583 = vpop.f32.mrf.mxu0
        %v1584 = vadd.f32 0.0, %v1583
        %v1585 = vpop.f32.mrf.mxu0
        %v1586 = vadd.f32 0.0, %v1585
        %v1587 = vpop.f32.mrf.mxu0
        %v1588 = vadd.f32 0.0, %v1587
        %1589 = vmatprep.mubr.bf16.mxu0 %v1242
        %1590 = vmatmul.mubr.bf16.gmra.mxu0 %v1241
        %v1591 = vpop.f32.mrf.mxu0
        %v1592 = vadd.f32 0.0, %v1591
        %v1593 = vpop.f32.mrf.mxu0
        %v1594 = vadd.f32 0.0, %v1593
        %v1595 = vpop.f32.mrf.mxu0
        %v1596 = vpop.f32.mrf.mxu0
        %1597 = vdwg.mxu0
        %1598 = vmatprep.subr.bf16.mxu0 %v1420
        %1599 = vmatpush1.bf16.msra.mxu0 %v1419
        %1600 = vmatprep.subr.bf16.mxu0 %v1418
        %1601 = vmatpush1.bf16.msra.mxu0 %v1417
        %1602 = vmatprep.subr.bf16.mxu0 %v1416
        %1603 = vmatpush1.bf16.msra.mxu0 %v1415
        %1604 = vmatprep.subr.bf16.mxu0 %v1414
        %1605 = vmatpush1.bf16.msra.mxu0 %v1413
        %1606 = vmatprep.subr.bf16.mxu0 %v1412
        %1607 = vmatpush1.bf16.msra.mxu0 %v1411
        %1608 = vmatprep.subr.bf16.mxu0 %v1410
        %1609 = vmatpush1.bf16.msra.mxu0 %v1409
        %1610 = vmatprep.subr.bf16.mxu0 %v1408
        %1611 = vmatpush1.bf16.msra.mxu0 %v1407
        %1612 = vmatprep.subr.bf16.mxu0 %v1406
        %1613 = vmatpush1.bf16.msra.mxu0 %v1405
        %1614 = vmatprep.subr.bf16.mxu0 %v1436
        %1615 = vmatpush2.bf16.msra.mxu0 %v1435
        %1616 = vmatprep.subr.bf16.mxu0 %v1434
        %1617 = vmatpush2.bf16.msra.mxu0 %v1433
        %1618 = vmatprep.subr.bf16.mxu0 %v1432
        %1619 = vmatpush2.bf16.msra.mxu0 %v1431
        %1620 = vmatprep.subr.bf16.mxu0 %v1430
        %1621 = vmatpush2.bf16.msra.mxu0 %v1429
        %1622 = vmatprep.subr.bf16.mxu0 %v1428
        %1623 = vmatpush2.bf16.msra.mxu0 %v1427
        %1624 = vmatprep.subr.bf16.mxu0 %v1426
        %1625 = vmatpush2.bf16.msra.mxu0 %v1425
        %1626 = vmatprep.subr.bf16.mxu0 %v1424
        %1627 = vmatpush2.bf16.msra.mxu0 %v1423
        %1628 = vmatprep.subr.bf16.mxu0 %v1422
        %1629 = vmatpush2.bf16.msra.mxu0 %v1421
        %1630 = vmatprep.mubr.bf16.mxu0 %v1196
        %1631 = vmatmul.mubr.bf16.gmra.mxu0 %v1195
        %v1632 = vpop.f32.mrf.mxu0
        %v1633 = vadd.f32 %v1472, %v1632
        %v1634 = vpop.f32.mrf.mxu0
        %v1635 = vadd.f32 %v1474, %v1634
        %v1636 = vpop.f32.mrf.mxu0
        %v1637 = vadd.f32 %v1476, %v1636
        %v1638 = vpop.f32.mrf.mxu0
        %v1639 = vadd.f32 %v1478, %v1638
        %1640 = vmatprep.mubr.bf16.mxu0 %v1200
        %1641 = vmatmul.mubr.bf16.gmra.mxu0 %v1199
        %v1642 = vpop.f32.mrf.mxu0
        %v1643 = vadd.f32 %v1482, %v1642
        %v1644 = vpop.f32.mrf.mxu0
        %v1645 = vadd.f32 %v1484, %v1644
        %v1646 = vpop.f32.mrf.mxu0
        %v1647 = vadd.f32 %v1486, %v1646
        %v1648 = vpop.f32.mrf.mxu0
        %v1649 = vadd.f32 %v1488, %v1648
        %1650 = vmatprep.mubr.bf16.mxu0 %v1204
        %1651 = vmatmul.mubr.bf16.gmra.mxu0 %v1203
        %v1652 = vpop.f32.mrf.mxu0
        %v1653 = vadd.f32 %v1492, %v1652
        %v1654 = vpop.f32.mrf.mxu0
        %v1655 = vadd.f32 %v1494, %v1654
        %v1656 = vpop.f32.mrf.mxu0
        %v1657 = vadd.f32 %v1496, %v1656
        %v1658 = vpop.f32.mrf.mxu0
        %v1659 = vadd.f32 %v1498, %v1658
        %1660 = vmatprep.mubr.bf16.mxu0 %v1208
        %1661 = vmatmul.mubr.bf16.gmra.mxu0 %v1207
        %v1662 = vpop.f32.mrf.mxu0
        %v1663 = vadd.f32 %v1502, %v1662
        %v1664 = vpop.f32.mrf.mxu0
        %v1665 = vadd.f32 %v1504, %v1664
        %v1666 = vpop.f32.mrf.mxu0
        %v1667 = vadd.f32 %v1506, %v1666
        %v1668 = vpop.f32.mrf.mxu0
        %v1669 = vadd.f32 %v1508, %v1668
        %1670 = vmatprep.mubr.bf16.mxu0 %v1212
        %1671 = vmatmul.mubr.bf16.gmra.mxu0 %v1211
        %v1672 = vpop.f32.mrf.mxu0
        %v1673 = vadd.f32 %v1512, %v1672
        %v1674 = vpop.f32.mrf.mxu0
        %v1675 = vadd.f32 %v1514, %v1674
        %v1676 = vpop.f32.mrf.mxu0
        %v1677 = vadd.f32 %v1516, %v1676
        %v1678 = vpop.f32.mrf.mxu0
        %v1679 = vadd.f32 %v1518, %v1678
        %1680 = vmatprep.mubr.bf16.mxu0 %v1216
        %1681 = vmatmul.mubr.bf16.gmra.mxu0 %v1215
        %v1682 = vpop.f32.mrf.mxu0
        %v1683 = vadd.f32 %v1522, %v1682
        %v1684 = vpop.f32.mrf.mxu0
        %v1685 = vadd.f32 %v1524, %v1684
        %v1686 = vpop.f32.mrf.mxu0
        %v1687 = vadd.f32 %v1526, %v1686
        %v1688 = vpop.f32.mrf.mxu0
        %v1689 = vadd.f32 %v1528, %v1688
        %1690 = vmatprep.mubr.bf16.mxu0 %v1220
        %1691 = vmatmul.mubr.bf16.gmra.mxu0 %v1219
        %v1692 = vpop.f32.mrf.mxu0
        %v1693 = vadd.f32 %v1532, %v1692
        %v1694 = vpop.f32.mrf.mxu0
        %v1695 = vadd.f32 %v1534, %v1694
        %v1696 = vpop.f32.mrf.mxu0
        %v1697 = vadd.f32 %v1536, %v1696
        %v1698 = vpop.f32.mrf.mxu0
        %v1699 = vadd.f32 %v1538, %v1698
        %1700 = vmatprep.mubr.bf16.mxu0 %v1224
        %1701 = vmatmul.mubr.bf16.gmra.mxu0 %v1223
        %v1702 = vpop.f32.mrf.mxu0
        %v1703 = vadd.f32 %v1542, %v1702
        %v1704 = vpop.f32.mrf.mxu0
        %v1705 = vadd.f32 %v1544, %v1704
        %v1706 = vpop.f32.mrf.mxu0
        %v1707 = vadd.f32 %v1546, %v1706
        %v1708 = vpop.f32.mrf.mxu0
        %v1709 = vadd.f32 %v1548, %v1708
        %1710 = vmatprep.mubr.bf16.mxu0 %v1228
        %1711 = vmatmul.mubr.bf16.gmra.mxu0 %v1227
        %v1712 = vpop.f32.mrf.mxu0
        %v1713 = vadd.f32 %v1552, %v1712
        %v1714 = vpop.f32.mrf.mxu0
        %v1715 = vadd.f32 %v1554, %v1714
        %v1716 = vpop.f32.mrf.mxu0
        %v1717 = vadd.f32 %v1556, %v1716
        %v1718 = vpop.f32.mrf.mxu0
        %v1719 = vadd.f32 %v1558, %v1718
        %1720 = vmatprep.mubr.bf16.mxu0 %v1232
        %1721 = vmatmul.mubr.bf16.gmra.mxu0 %v1231
        %v1722 = vpop.f32.mrf.mxu0
        %v1723 = vadd.f32 %v1562, %v1722
        %v1724 = vpop.f32.mrf.mxu0
        %v1725 = vadd.f32 %v1564, %v1724
        %v1726 = vpop.f32.mrf.mxu0
        %v1727 = vadd.f32 %v1566, %v1726
        %v1728 = vpop.f32.mrf.mxu0
        %v1729 = vadd.f32 %v1568, %v1728
        %1730 = vmatprep.mubr.bf16.mxu0 %v1236
        %1731 = vmatmul.mubr.bf16.gmra.mxu0 %v1235
        %v1732 = vpop.f32.mrf.mxu0
        %v1733 = vadd.f32 %v1572, %v1732
        %v1734 = vpop.f32.mrf.mxu0
        %v1735 = vadd.f32 %v1574, %v1734
        %v1736 = vpop.f32.mrf.mxu0
        %v1737 = vadd.f32 %v1576, %v1736
        %v1738 = vpop.f32.mrf.mxu0
        %v1739 = vadd.f32 %v1578, %v1738
        %1740 = vmatprep.mubr.bf16.mxu0 %v1240
        %1741 = vmatmul.mubr.bf16.gmra.mxu0 %v1239
        %v1742 = vpop.f32.mrf.mxu0
        %v1743 = vadd.f32 %v1582, %v1742
        %v1744 = vpop.f32.mrf.mxu0
        %v1745 = vadd.f32 %v1584, %v1744
        %v1746 = vpop.f32.mrf.mxu0
        %v1747 = vadd.f32 %v1586, %v1746
        %v1748 = vpop.f32.mrf.mxu0
        %v1749 = vadd.f32 %v1588, %v1748
        %1750 = vmatprep.mubr.bf16.mxu0 %v1244
        %1751 = vmatmul.mubr.bf16.gmra.mxu0 %v1243
        %v1752 = vpop.f32.mrf.mxu0
        %v1753 = vadd.f32 %v1592, %v1752
        %v1754 = vpop.f32.mrf.mxu0
        %v1755 = vadd.f32 %v1594, %v1754
        %v1756 = vpop.f32.mrf.mxu0
        %v1757 = vpop.f32.mrf.mxu0
        %1758 = vdwg.mxu0
        %v1759 = vadd.f32 %v1143, %v1633
        %v1760 = vadd.f32 %v1144, %v1635
        %v1761 = vadd.f32 %v1145, %v1637
        %v1762 = vadd.f32 %v1146, %v1639
        %v1763 = vadd.f32 %v1147, %v1643
        %v1764 = vadd.f32 %v1148, %v1645
        %v1765 = vadd.f32 %v1149, %v1647
        %v1766 = vadd.f32 %v1150, %v1649
        %v1767 = vadd.f32 %v1151, %v1653
        %v1768 = vadd.f32 %v1152, %v1655
        %v1769 = vadd.f32 %v1153, %v1657
        %v1770 = vadd.f32 %v1154, %v1659
        %v1771 = vadd.f32 %v1155, %v1663
        %v1772 = vadd.f32 %v1156, %v1665
        %v1773 = vadd.f32 %v1157, %v1667
        %v1774 = vadd.f32 %v1158, %v1669
        %v1775 = vadd.f32 %v1159, %v1673
        %v1776 = vadd.f32 %v1160, %v1675
        %v1777 = vadd.f32 %v1161, %v1677
        %v1778 = vadd.f32 %v1162, %v1679
        %v1779 = vadd.f32 %v1163, %v1683
        %v1780 = vadd.f32 %v1164, %v1685
        %v1781 = vadd.f32 %v1165, %v1687
        %v1782 = vadd.f32 %v1166, %v1689
        %v1783 = vadd.f32 %v1167, %v1693
        %v1784 = vadd.f32 %v1168, %v1695
        %v1785 = vadd.f32 %v1169, %v1697
        %v1786 = vadd.f32 %v1170, %v1699
        %v1787 = vadd.f32 %v1171, %v1703
        %v1788 = vadd.f32 %v1172, %v1705
        %v1789 = vadd.f32 %v1173, %v1707
        %v1790 = vadd.f32 %v1174, %v1709
        %v1791 = vadd.f32 %v1175, %v1713
        %v1792 = vadd.f32 %v1176, %v1715
        %v1793 = vadd.f32 %v1177, %v1717
        %v1794 = vadd.f32 %v1178, %v1719
        %v1795 = vadd.f32 %v1179, %v1723
        %v1796 = vadd.f32 %v1180, %v1725
        %v1797 = vadd.f32 %v1181, %v1727
        %v1798 = vadd.f32 %v1182, %v1729
        %v1799 = vadd.f32 %v1183, %v1733
        %v1800 = vadd.f32 %v1184, %v1735
        %v1801 = vadd.f32 %v1185, %v1737
        %v1802 = vadd.f32 %v1186, %v1739
        %v1803 = vadd.f32 %v1187, %v1743
        %v1804 = vadd.f32 %v1188, %v1745
        %v1805 = vadd.f32 %v1189, %v1747
        %v1806 = vadd.f32 %v1190, %v1749
        %v1807 = vadd.f32 %v1191, %v1753
        %v1808 = vadd.f32 %v1192, %v1755
        %1809 = vst [vmem:[#allocation2] sm:$0xff] %v1759
        %1810 = vst [vmem:[#allocation2 + $0x8] sm:$0xff] %v1760
        %1811 = vst [vmem:[#allocation2 + $0x10] sm:$0xff] %v1761
        %1812 = vst [vmem:[#allocation2 + $0x18] sm:$0xff] %v1762
        %1813 = vst [vmem:[#allocation2 + $0x20] sm:$0xff] %v1763
        %1814 = vst [vmem:[#allocation2 + $0x28] sm:$0xff] %v1764
        %1815 = vst [vmem:[#allocation2 + $0x30] sm:$0xff] %v1765
        %1816 = vst [vmem:[#allocation2 + $0x38] sm:$0xff] %v1766
        %1817 = vst [vmem:[#allocation2 + $0x40] sm:$0xff] %v1767
        %1818 = vst [vmem:[#allocation2 + $0x48] sm:$0xff] %v1768
        %1819 = vst [vmem:[#allocation2 + $0x50] sm:$0xff] %v1769
        %1820 = vst [vmem:[#allocation2 + $0x58] sm:$0xff] %v1770
        %1821 = vst [vmem:[#allocation2 + $0x60] sm:$0xff] %v1771
        %1822 = vst [vmem:[#allocation2 + $0x68] sm:$0xff] %v1772
        %1823 = vst [vmem:[#allocation2 + $0x70] sm:$0xff] %v1773
        %1824 = vst [vmem:[#allocation2 + $0x78] sm:$0xff] %v1774
        %1825 = vst [vmem:[#allocation2 + $0x80] sm:$0xff] %v1775
        %1826 = vst [vmem:[#allocation2 + $0x88] sm:$0xff] %v1776
        %1827 = vst [vmem:[#allocation2 + $0x90] sm:$0xff] %v1777
        %1828 = vst [vmem:[#allocation2 + $0x98] sm:$0xff] %v1778
        %1829 = vst [vmem:[#allocation2 + $0xa0] sm:$0xff] %v1779
        %1830 = vst [vmem:[#allocation2 + $0xa8] sm:$0xff] %v1780
        %1831 = vst [vmem:[#allocation2 + $0xb0] sm:$0xff] %v1781
        %1832 = vst [vmem:[#allocation2 + $0xb8] sm:$0xff] %v1782
        %1833 = vst [vmem:[#allocation2 + $0xc0] sm:$0xff] %v1783
        %1834 = vst [vmem:[#allocation2 + $0xc8] sm:$0xff] %v1784
        %1835 = vst [vmem:[#allocation2 + $0xd0] sm:$0xff] %v1785
        %1836 = vst [vmem:[#allocation2 + $0xd8] sm:$0xff] %v1786
        %1837 = vst [vmem:[#allocation2 + $0xe0] sm:$0xff] %v1787
        %1838 = vst [vmem:[#allocation2 + $0xe8] sm:$0xff] %v1788
        %1839 = vst [vmem:[#allocation2 + $0xf0] sm:$0xff] %v1789
        %1840 = vst [vmem:[#allocation2 + $0xf8] sm:$0xff] %v1790
        %1841 = vst [vmem:[#allocation2 + $0x100] sm:$0xff] %v1791
        %1842 = vst [vmem:[#allocation2 + $0x108] sm:$0xff] %v1792
        %1843 = vst [vmem:[#allocation2 + $0x110] sm:$0xff] %v1793
        %1844 = vst [vmem:[#allocation2 + $0x118] sm:$0xff] %v1794
        %1845 = vst [vmem:[#allocation2 + $0x120] sm:$0xff] %v1795
        %1846 = vst [vmem:[#allocation2 + $0x128] sm:$0xff] %v1796
        %1847 = vst [vmem:[#allocation2 + $0x130] sm:$0xff] %v1797
        %1848 = vst [vmem:[#allocation2 + $0x138] sm:$0xff] %v1798
        %1849 = vst [vmem:[#allocation2 + $0x140] sm:$0xff] %v1799
        %1850 = vst [vmem:[#allocation2 + $0x148] sm:$0xff] %v1800
        %1851 = vst [vmem:[#allocation2 + $0x150] sm:$0xff] %v1801
        %1852 = vst [vmem:[#allocation2 + $0x158] sm:$0xff] %v1802
        %1853 = vst [vmem:[#allocation2 + $0x160] sm:$0xff] %v1803
        %1854 = vst [vmem:[#allocation2 + $0x168] sm:$0xff] %v1804
        %1855 = vst [vmem:[#allocation2 + $0x170] sm:$0xff] %v1805
        %1856 = vst [vmem:[#allocation2 + $0x178] sm:$0xff] %v1806
        %1857 = vst [vmem:[#allocation2 + $0x180] sm:$0xff] %v1807
        %1858 = vst [vmem:[#allocation2 + $0x188] sm:$0xff] %v1808
        %p1859 = scmp.eq.s32.totalorder %s30, 1
        // Predicated region
        $region57: #{tpu_custom_call.1} parent=35 // pred_check
          %p1860 = pneg %p1859
        $region58: #{tpu_custom_call.1} parent=35 // pred_check_branch
          %1862 = sbr.rel (%p1860) target = $region60
        $region59: #{tpu_custom_call.1} parent=35 // pred_region
          %v1863 = vld [vmem:[#allocation3] sm:$0xff]
          %v1864 = vld [vmem:[#allocation3 + $0x8] sm:$0xff]
          %v1865 = vld [vmem:[#allocation3 + $0x10] sm:$0xff]
          %v1866 = vld [vmem:[#allocation3 + $0x18] sm:$0xff]
          %v1867 = vld [vmem:[#allocation3 + $0x20] sm:$0xff]
          %v1868 = vld [vmem:[#allocation3 + $0x28] sm:$0xff]
          %v1869 = vld [vmem:[#allocation3 + $0x30] sm:$0xff]
          %v1870 = vld [vmem:[#allocation3 + $0x38] sm:$0xff]
          %v1871 = vld [vmem:[#allocation3 + $0x40] sm:$0xff]
          %v1872 = vld [vmem:[#allocation3 + $0x48] sm:$0xff]
          %v1873 = vld [vmem:[#allocation3 + $0x50] sm:$0xff]
          %v1874 = vld [vmem:[#allocation3 + $0x58] sm:$0xff]
          %v1875 = vld [vmem:[#allocation3 + $0x60] sm:$0xff]
          %v1876 = vld [vmem:[#allocation3 + $0x68] sm:$0xff]
          %v1877 = vld [vmem:[#allocation3 + $0x70] sm:$0xff]
          %v1878 = vld [vmem:[#allocation3 + $0x78] sm:$0xff]
          %v1879 = vld [vmem:[#allocation3 + $0x80] sm:$0xff]
          %v1880 = vld [vmem:[#allocation3 + $0x88] sm:$0xff]
          %v1881 = vld [vmem:[#allocation3 + $0x90] sm:$0xff]
          %v1882 = vld [vmem:[#allocation3 + $0x98] sm:$0xff]
          %v1883 = vld [vmem:[#allocation3 + $0xa0] sm:$0xff]
          %v1884 = vld [vmem:[#allocation3 + $0xa8] sm:$0xff]
          %v1885 = vld [vmem:[#allocation3 + $0xb0] sm:$0xff]
          %v1886 = vld [vmem:[#allocation3 + $0xb8] sm:$0xff]
          %v1887 = vld [vmem:[#allocation3 + $0xc0] sm:$0xff]
          %v1888 = vmax.f32 %v1863, 1.0
          %v1889 = vmax.f32 %v1864, 1.0
          %v1890 = vmax.f32 %v1865, 1.0
          %v1891 = vmax.f32 %v1866, 1.0
          %v1892 = vmax.f32 %v1867, 1.0
          %v1893 = vmax.f32 %v1868, 1.0
          %v1894 = vmax.f32 %v1869, 1.0
          %v1895 = vmax.f32 %v1870, 1.0
          %v1896 = vmax.f32 %v1871, 1.0
          %v1897 = vmax.f32 %v1872, 1.0
          %v1898 = vmax.f32 %v1873, 1.0
          %v1899 = vmax.f32 %v1874, 1.0
          %v1900 = vmax.f32 %v1875, 1.0
          %v1901 = vmax.f32 %v1876, 1.0
          %v1902 = vmax.f32 %v1877, 1.0
          %v1903 = vmax.f32 %v1878, 1.0
          %v1904 = vmax.f32 %v1879, 1.0
          %v1905 = vmax.f32 %v1880, 1.0
          %v1906 = vmax.f32 %v1881, 1.0
          %v1907 = vmax.f32 %v1882, 1.0
          %v1908 = vmax.f32 %v1883, 1.0
          %v1909 = vmax.f32 %v1884, 1.0
          %v1910 = vmax.f32 %v1885, 1.0
          %v1911 = vmax.f32 %v1886, 1.0
          %v1912 = vmax.f32 %v1887, 1.0
          %v1913 = vrcp.pop %v1888
          %v1914 = vrcp.pop %v1889
          %v1915 = vrcp.pop %v1890
          %v1916 = vrcp.pop %v1891
          %v1917 = vrcp.pop %v1892
          %v1918 = vrcp.pop %v1893
          %v1919 = vrcp.pop %v1894
          %v1920 = vrcp.pop %v1895
          %v1921 = vrcp.pop %v1896
          %v1922 = vrcp.pop %v1897
          %v1923 = vrcp.pop %v1898
          %v1924 = vrcp.pop %v1899
          %v1925 = vrcp.pop %v1900
          %v1926 = vrcp.pop %v1901
          %v1927 = vrcp.pop %v1902
          %v1928 = vrcp.pop %v1903
          %v1929 = vrcp.pop %v1904
          %v1930 = vrcp.pop %v1905
          %v1931 = vrcp.pop %v1906
          %v1932 = vrcp.pop %v1907
          %v1933 = vrcp.pop %v1908
          %v1934 = vrcp.pop %v1909
          %v1935 = vrcp.pop %v1910
          %v1936 = vrcp.pop %v1911
          %v1937 = vrcp.pop %v1912
          %v1938 = vld [vmem:[#allocation2] sm:$0xff]
          %v1939 = vld [vmem:[#allocation2 + $0x8] sm:$0xff]
          %v1940 = vld [vmem:[#allocation2 + $0x10] sm:$0xff]
          %v1941 = vld [vmem:[#allocation2 + $0x18] sm:$0xff]
          %v1942 = vld [vmem:[#allocation2 + $0x20] sm:$0xff]
          %v1943 = vld [vmem:[#allocation2 + $0x28] sm:$0xff]
          %v1944 = vld [vmem:[#allocation2 + $0x30] sm:$0xff]
          %v1945 = vld [vmem:[#allocation2 + $0x38] sm:$0xff]
          %v1946 = vld [vmem:[#allocation2 + $0x40] sm:$0xff]
          %v1947 = vld [vmem:[#allocation2 + $0x48] sm:$0xff]
          %v1948 = vld [vmem:[#allocation2 + $0x50] sm:$0xff]
          %v1949 = vld [vmem:[#allocation2 + $0x58] sm:$0xff]
          %v1950 = vld [vmem:[#allocation2 + $0x60] sm:$0xff]
          %v1951 = vld [vmem:[#allocation2 + $0x68] sm:$0xff]
          %v1952 = vld [vmem:[#allocation2 + $0x70] sm:$0xff]
          %v1953 = vld [vmem:[#allocation2 + $0x78] sm:$0xff]
          %v1954 = vld [vmem:[#allocation2 + $0x80] sm:$0xff]
          %v1955 = vld [vmem:[#allocation2 + $0x88] sm:$0xff]
          %v1956 = vld [vmem:[#allocation2 + $0x90] sm:$0xff]
          %v1957 = vld [vmem:[#allocation2 + $0x98] sm:$0xff]
          %v1958 = vld [vmem:[#allocation2 + $0xa0] sm:$0xff]
          %v1959 = vld [vmem:[#allocation2 + $0xa8] sm:$0xff]
          %v1960 = vld [vmem:[#allocation2 + $0xb0] sm:$0xff]
          %v1961 = vld [vmem:[#allocation2 + $0xb8] sm:$0xff]
          %v1962 = vld [vmem:[#allocation2 + $0xc0] sm:$0xff]
          %v1963 = vld [vmem:[#allocation2 + $0xc8] sm:$0xff]
          %v1964 = vld [vmem:[#allocation2 + $0xd0] sm:$0xff]
          %v1965 = vld [vmem:[#allocation2 + $0xd8] sm:$0xff]
          %v1966 = vld [vmem:[#allocation2 + $0xe0] sm:$0xff]
          %v1967 = vld [vmem:[#allocation2 + $0xe8] sm:$0xff]
          %v1968 = vld [vmem:[#allocation2 + $0xf0] sm:$0xff]
          %v1969 = vld [vmem:[#allocation2 + $0xf8] sm:$0xff]
          %v1970 = vld [vmem:[#allocation2 + $0x100] sm:$0xff]
          %v1971 = vld [vmem:[#allocation2 + $0x108] sm:$0xff]
          %v1972 = vld [vmem:[#allocation2 + $0x110] sm:$0xff]
          %v1973 = vld [vmem:[#allocation2 + $0x118] sm:$0xff]
          %v1974 = vld [vmem:[#allocation2 + $0x120] sm:$0xff]
          %v1975 = vld [vmem:[#allocation2 + $0x128] sm:$0xff]
          %v1976 = vld [vmem:[#allocation2 + $0x130] sm:$0xff]
          %v1977 = vld [vmem:[#allocation2 + $0x138] sm:$0xff]
          %v1978 = vld [vmem:[#allocation2 + $0x140] sm:$0xff]
          %v1979 = vld [vmem:[#allocation2 + $0x148] sm:$0xff]
          %v1980 = vld [vmem:[#allocation2 + $0x150] sm:$0xff]
          %v1981 = vld [vmem:[#allocation2 + $0x158] sm:$0xff]
          %v1982 = vld [vmem:[#allocation2 + $0x160] sm:$0xff]
          %v1983 = vld [vmem:[#allocation2 + $0x168] sm:$0xff]
          %v1984 = vld [vmem:[#allocation2 + $0x170] sm:$0xff]
          %v1985 = vld [vmem:[#allocation2 + $0x178] sm:$0xff]
          %v1986 = vld [vmem:[#allocation2 + $0x180] sm:$0xff]
          %v1987 = vld [vmem:[#allocation2 + $0x188] sm:$0xff]
          %1989 = vset.pattern.permute.xlu0 0
          %1990 = vperm.xlu0 %1989, %v1913
          %v1991 = vpop.permute.xlu0 %1990
          %1994 = vset.pattern.permute.xlu0 0
          %1995 = vperm.xlu0 %1994, %v1914
          %v1996 = vpop.permute.xlu0 %1995
          %1999 = vset.pattern.permute.xlu0 0
          %2000 = vperm.xlu0 %1999, %v1915
          %v2001 = vpop.permute.xlu0 %2000
          %2004 = vset.pattern.permute.xlu0 0
          %2005 = vperm.xlu0 %2004, %v1916
          %v2006 = vpop.permute.xlu0 %2005
          %2009 = vset.pattern.permute.xlu0 0
          %2010 = vperm.xlu0 %2009, %v1917
          %v2011 = vpop.permute.xlu0 %2010
          %2014 = vset.pattern.permute.xlu0 0
          %2015 = vperm.xlu0 %2014, %v1918
          %v2016 = vpop.permute.xlu0 %2015
          %2019 = vset.pattern.permute.xlu0 0
          %2020 = vperm.xlu0 %2019, %v1919
          %v2021 = vpop.permute.xlu0 %2020
          %2024 = vset.pattern.permute.xlu0 0
          %2025 = vperm.xlu0 %2024, %v1920
          %v2026 = vpop.permute.xlu0 %2025
          %2029 = vset.pattern.permute.xlu0 0
          %2030 = vperm.xlu0 %2029, %v1921
          %v2031 = vpop.permute.xlu0 %2030
          %2034 = vset.pattern.permute.xlu0 0
          %2035 = vperm.xlu0 %2034, %v1922
          %v2036 = vpop.permute.xlu0 %2035
          %2039 = vset.pattern.permute.xlu0 0
          %2040 = vperm.xlu0 %2039, %v1923
          %v2041 = vpop.permute.xlu0 %2040
          %2044 = vset.pattern.permute.xlu0 0
          %2045 = vperm.xlu0 %2044, %v1924
          %v2046 = vpop.permute.xlu0 %2045
          %2049 = vset.pattern.permute.xlu0 0
          %2050 = vperm.xlu0 %2049, %v1925
          %v2051 = vpop.permute.xlu0 %2050
          %2054 = vset.pattern.permute.xlu0 0
          %2055 = vperm.xlu0 %2054, %v1926
          %v2056 = vpop.permute.xlu0 %2055
          %2059 = vset.pattern.permute.xlu0 0
          %2060 = vperm.xlu0 %2059, %v1927
          %v2061 = vpop.permute.xlu0 %2060
          %2064 = vset.pattern.permute.xlu0 0
          %2065 = vperm.xlu0 %2064, %v1928
          %v2066 = vpop.permute.xlu0 %2065
          %2069 = vset.pattern.permute.xlu0 0
          %2070 = vperm.xlu0 %2069, %v1929
          %v2071 = vpop.permute.xlu0 %2070
          %2074 = vset.pattern.permute.xlu0 0
          %2075 = vperm.xlu0 %2074, %v1930
          %v2076 = vpop.permute.xlu0 %2075
          %2079 = vset.pattern.permute.xlu0 0
          %2080 = vperm.xlu0 %2079, %v1931
          %v2081 = vpop.permute.xlu0 %2080
          %2084 = vset.pattern.permute.xlu0 0
          %2085 = vperm.xlu0 %2084, %v1932
          %v2086 = vpop.permute.xlu0 %2085
          %2089 = vset.pattern.permute.xlu0 0
          %2090 = vperm.xlu0 %2089, %v1933
          %v2091 = vpop.permute.xlu0 %2090
          %2094 = vset.pattern.permute.xlu0 0
          %2095 = vperm.xlu0 %2094, %v1934
          %v2096 = vpop.permute.xlu0 %2095
          %2099 = vset.pattern.permute.xlu0 0
          %2100 = vperm.xlu0 %2099, %v1935
          %v2101 = vpop.permute.xlu0 %2100
          %2104 = vset.pattern.permute.xlu0 0
          %2105 = vperm.xlu0 %2104, %v1936
          %v2106 = vpop.permute.xlu0 %2105
          %2109 = vset.pattern.permute.xlu0 0
          %2110 = vperm.xlu0 %2109, %v1937
          %v2111 = vpop.permute.xlu0 %2110
          %v2113 = vmul.f32 %v1938, %v1991
          %v2114 = vmul.f32 %v1939, %v1991
          %v2115 = vmul.f32 %v1940, %v1996
          %v2116 = vmul.f32 %v1941, %v1996
          %v2117 = vmul.f32 %v1942, %v2001
          %v2118 = vmul.f32 %v1943, %v2001
          %v2119 = vmul.f32 %v1944, %v2006
          %v2120 = vmul.f32 %v1945, %v2006
          %v2121 = vmul.f32 %v1946, %v2011
          %v2122 = vmul.f32 %v1947, %v2011
          %v2123 = vmul.f32 %v1948, %v2016
          %v2124 = vmul.f32 %v1949, %v2016
          %v2125 = vmul.f32 %v1950, %v2021
          %v2126 = vmul.f32 %v1951, %v2021
          %v2127 = vmul.f32 %v1952, %v2026
          %v2128 = vmul.f32 %v1953, %v2026
          %v2129 = vmul.f32 %v1954, %v2031
          %v2130 = vmul.f32 %v1955, %v2031
          %v2131 = vmul.f32 %v1956, %v2036
          %v2132 = vmul.f32 %v1957, %v2036
          %v2133 = vmul.f32 %v1958, %v2041
          %v2134 = vmul.f32 %v1959, %v2041
          %v2135 = vmul.f32 %v1960, %v2046
          %v2136 = vmul.f32 %v1961, %v2046
          %v2137 = vmul.f32 %v1962, %v2051
          %v2138 = vmul.f32 %v1963, %v2051
          %v2139 = vmul.f32 %v1964, %v2056
          %v2140 = vmul.f32 %v1965, %v2056
          %v2141 = vmul.f32 %v1966, %v2061
          %v2142 = vmul.f32 %v1967, %v2061
          %v2143 = vmul.f32 %v1968, %v2066
          %v2144 = vmul.f32 %v1969, %v2066
          %v2145 = vmul.f32 %v1970, %v2071
          %v2146 = vmul.f32 %v1971, %v2071
          %v2147 = vmul.f32 %v1972, %v2076
          %v2148 = vmul.f32 %v1973, %v2076
          %v2149 = vmul.f32 %v1974, %v2081
          %v2150 = vmul.f32 %v1975, %v2081
          %v2151 = vmul.f32 %v1976, %v2086
          %v2152 = vmul.f32 %v1977, %v2086
          %v2153 = vmul.f32 %v1978, %v2091
          %v2154 = vmul.f32 %v1979, %v2091
          %v2155 = vmul.f32 %v1980, %v2096
          %v2156 = vmul.f32 %v1981, %v2096
          %v2157 = vmul.f32 %v1982, %v2101
          %v2158 = vmul.f32 %v1983, %v2101
          %v2159 = vmul.f32 %v1984, %v2106
          %v2160 = vmul.f32 %v1985, %v2106
          %v2161 = vmul.f32 %v1986, %v2111
          %v2162 = vmul.f32 %v1987, %v2111
          %v2163 = vtanh.pop %v2113
          %v2164 = vtanh.pop %v2114
          %v2165 = vtanh.pop %v2115
          %v2166 = vtanh.pop %v2116
          %v2167 = vtanh.pop %v2117
          %v2168 = vtanh.pop %v2118
          %v2169 = vtanh.pop %v2119
          %v2170 = vtanh.pop %v2120
          %v2171 = vtanh.pop %v2121
          %v2172 = vtanh.pop %v2122
          %v2173 = vtanh.pop %v2123
          %v2174 = vtanh.pop %v2124
          %v2175 = vtanh.pop %v2125
          %v2176 = vtanh.pop %v2126
          %v2177 = vtanh.pop %v2127
          %v2178 = vtanh.pop %v2128
          %v2179 = vtanh.pop %v2129
          %v2180 = vtanh.pop %v2130
          %v2181 = vtanh.pop %v2131
          %v2182 = vtanh.pop %v2132
          %v2183 = vtanh.pop %v2133
          %v2184 = vtanh.pop %v2134
          %v2185 = vtanh.pop %v2135
          %v2186 = vtanh.pop %v2136
          %v2187 = vtanh.pop %v2137
          %v2188 = vtanh.pop %v2138
          %v2189 = vtanh.pop %v2139
          %v2190 = vtanh.pop %v2140
          %v2191 = vtanh.pop %v2141
          %v2192 = vtanh.pop %v2142
          %v2193 = vtanh.pop %v2143
          %v2194 = vtanh.pop %v2144
          %v2195 = vtanh.pop %v2145
          %v2196 = vtanh.pop %v2146
          %v2197 = vtanh.pop %v2147
          %v2198 = vtanh.pop %v2148
          %v2199 = vtanh.pop %v2149
          %v2200 = vtanh.pop %v2150
          %v2201 = vtanh.pop %v2151
          %v2202 = vtanh.pop %v2152
          %v2203 = vtanh.pop %v2153
          %v2204 = vtanh.pop %v2154
          %v2205 = vtanh.pop %v2155
          %v2206 = vtanh.pop %v2156
          %v2207 = vtanh.pop %v2157
          %v2208 = vtanh.pop %v2158
          %v2209 = vtanh.pop %v2159
          %v2210 = vtanh.pop %v2160
          %v2211 = vtanh.pop %v2161
          %v2212 = vtanh.pop %v2162
          %2213 = vst [vmem:[#allocation12] sm:$0xff] %v2163
          %2214 = vst [vmem:[#allocation12 + $0x8] sm:$0xff] %v2164
          %2215 = vst [vmem:[#allocation12 + $0x10] sm:$0xff] %v2165
          %2216 = vst [vmem:[#allocation12 + $0x18] sm:$0xff] %v2166
          %2217 = vst [vmem:[#allocation12 + $0x20] sm:$0xff] %v2167
          %2218 = vst [vmem:[#allocation12 + $0x28] sm:$0xff] %v2168
          %2219 = vst [vmem:[#allocation12 + $0x30] sm:$0xff] %v2169
          %2220 = vst [vmem:[#allocation12 + $0x38] sm:$0xff] %v2170
          %2221 = vst [vmem:[#allocation12 + $0x40] sm:$0xff] %v2171
          %2222 = vst [vmem:[#allocation12 + $0x48] sm:$0xff] %v2172
          %2223 = vst [vmem:[#allocation12 + $0x50] sm:$0xff] %v2173
          %2224 = vst [vmem:[#allocation12 + $0x58] sm:$0xff] %v2174
          %2225 = vst [vmem:[#allocation12 + $0x60] sm:$0xff] %v2175
          %2226 = vst [vmem:[#allocation12 + $0x68] sm:$0xff] %v2176
          %2227 = vst [vmem:[#allocation12 + $0x70] sm:$0xff] %v2177
          %2228 = vst [vmem:[#allocation12 + $0x78] sm:$0xff] %v2178
          %2229 = vst [vmem:[#allocation12 + $0x80] sm:$0xff] %v2179
          %2230 = vst [vmem:[#allocation12 + $0x88] sm:$0xff] %v2180
          %2231 = vst [vmem:[#allocation12 + $0x90] sm:$0xff] %v2181
          %2232 = vst [vmem:[#allocation12 + $0x98] sm:$0xff] %v2182
          %2233 = vst [vmem:[#allocation12 + $0xa0] sm:$0xff] %v2183
          %2234 = vst [vmem:[#allocation12 + $0xa8] sm:$0xff] %v2184
          %2235 = vst [vmem:[#allocation12 + $0xb0] sm:$0xff] %v2185
          %2236 = vst [vmem:[#allocation12 + $0xb8] sm:$0xff] %v2186
          %2237 = vst [vmem:[#allocation12 + $0xc0] sm:$0xff] %v2187
          %2238 = vst [vmem:[#allocation12 + $0xc8] sm:$0xff] %v2188
          %2239 = vst [vmem:[#allocation12 + $0xd0] sm:$0xff] %v2189
          %2240 = vst [vmem:[#allocation12 + $0xd8] sm:$0xff] %v2190
          %2241 = vst [vmem:[#allocation12 + $0xe0] sm:$0xff] %v2191
          %2242 = vst [vmem:[#allocation12 + $0xe8] sm:$0xff] %v2192
          %2243 = vst [vmem:[#allocation12 + $0xf0] sm:$0xff] %v2193
          %2244 = vst [vmem:[#allocation12 + $0xf8] sm:$0xff] %v2194
          %2245 = vst [vmem:[#allocation12 + $0x100] sm:$0xff] %v2195
          %2246 = vst [vmem:[#allocation12 + $0x108] sm:$0xff] %v2196
          %2247 = vst [vmem:[#allocation12 + $0x110] sm:$0xff] %v2197
          %2248 = vst [vmem:[#allocation12 + $0x118] sm:$0xff] %v2198
          %2249 = vst [vmem:[#allocation12 + $0x120] sm:$0xff] %v2199
          %2250 = vst [vmem:[#allocation12 + $0x128] sm:$0xff] %v2200
          %2251 = vst [vmem:[#allocation12 + $0x130] sm:$0xff] %v2201
          %2252 = vst [vmem:[#allocation12 + $0x138] sm:$0xff] %v2202
          %2253 = vst [vmem:[#allocation12 + $0x140] sm:$0xff] %v2203
          %2254 = vst [vmem:[#allocation12 + $0x148] sm:$0xff] %v2204
          %2255 = vst [vmem:[#allocation12 + $0x150] sm:$0xff] %v2205
          %2256 = vst [vmem:[#allocation12 + $0x158] sm:$0xff] %v2206
          %2257 = vst [vmem:[#allocation12 + $0x160] sm:$0xff] %v2207
          %2258 = vst [vmem:[#allocation12 + $0x168] sm:$0xff] %v2208
          %2259 = vst [vmem:[#allocation12 + $0x170] sm:$0xff] %v2209
          %2260 = vst [vmem:[#allocation12 + $0x178] sm:$0xff] %v2210
          %2261 = vst [vmem:[#allocation12 + $0x180] sm:$0xff] %v2211
          %2262 = vst [vmem:[#allocation12 + $0x188] sm:$0xff] %v2212
        $region60: #{tpu_custom_call.1} parent=35 // pred_fallthru
          _
        // Predicated region
        $region61: #{tpu_custom_call.1} parent=35 // pred_check
          %p2263 = pneg %p165
        $region62: #{tpu_custom_call.1} parent=35 // pred_check_branch
          %2265 = sbr.rel (%p2263) target = $region64
        $region63: #{tpu_custom_call.1} parent=35 // pred_region
          %s2266 = smul.u32 25, %s29
          %s2268 = ssub.s32 6400, 6400
          %2269 = vsyncadd [#allocation6], %s2268
          %s2270 = smul.addr %s2266, 2
          %s2271 = smul.addr %s2270, 128
          %s2272 = scalar_lea.hbm %s4, %s2271
          %s2273 = sshll.u32 [#allocation12], 4
          %s2274 = int_to_ptr.vmem [resolvable:$true] %s2273
          %2279 = dma.vmem_to_hbm [thread:$0]  %s2274, 6400, %s2272, [#allocation6], 256, 256, 16
        $region64: #{tpu_custom_call.1} parent=35 // pred_fallthru
          _
        // Predicated region
        $region65: #{tpu_custom_call.1} parent=35 // pred_check
          %p2280 = pneg %p165
        $region66: #{tpu_custom_call.1} parent=35 // pred_check_branch
          %2282 = sbr.rel (%p2280) target = $region68
        $region67: #{tpu_custom_call.1} parent=35 // pred_region
          %2283 = dma.done [#allocation6], 6400
        $region68: #{tpu_custom_call.1} parent=35 // pred_fallthru
          _
      $region36: #{tpu_custom_call.1} parent=5 // pred_fallthru
        _
      %p2284 = scmp.le.s32.totalorder 2, %s20
      // Predicated region
      $region69: #{tpu_custom_call.1} parent=5 // pred_check
        %p2285 = pneg %p2284
      $region70: #{tpu_custom_call.1} parent=5 // pred_check_branch
        %2287 = sbr.rel (%p2285) target = $region72
      $region71: #{tpu_custom_call.1} parent=5 // pred_region
        %s2288 = ssub.s32 %s20, 2
      $region72: #{tpu_custom_call.1} parent=5 // pred_fallthru
        _
    $region6: #{tpu_custom_call.1} parent=1 // loop_footer
      %s24 = sadd.s32 1, %s20
    $region7: #{tpu_custom_call.1} parent=1 // loop_footer_branch
      %19 = sbr.rel target = $region3
    $region8: #{tpu_custom_call.1} parent=1 // loop_exit
      _
    %2289 = vsyncpa [#allocation5], 1
    %s2290 = scalar_lea.sflag [#allocation5], 1
    %2291 = vsyncpa %s2290, 1
    %2292 = vsyncpa [#allocation8], 1
    %s2293 = scalar_lea.sflag [#allocation8], 1
    %2294 = vsyncpa %s2293, 1
    %2295 = vsyncpa [#allocation11], 1
    %s2296 = scalar_lea.sflag [#allocation11], 1
    %2297 = vsyncpa %s2296, 1
    %2298 = vsyncpa [#allocation6], 1
    %s2299 = scalar_lea.sflag [#allocation6], 1
    %2300 = vsyncpa %s2299, 1

</llo_original>
